<compile_context>
chip_gen: v5e
topology: v5e:2x2
jax: 0.10.0
libtpu: 0.0.40
codegen_flags: <defaults>
</compile_context>

<pallas_src>
import functools

import jax
import jax.numpy as jnp
from jax.experimental import pallas as pl
from jax.experimental.pallas import tpu as pltpu

BN_EPS = 1e-5
LANE = 128                      # vreg lane width / channel padding granule
VMEM_LIMIT = 48 * 1024 * 1024   # below v7x's 64 MiB physical, above defaults


def _round_up(x, m):
    return ((x + m - 1) // m) * m


def _row_tile(n):
    # Bigger tiles amortize per-step overhead; 512 hits ~85% of HBM roofline.
    if n >= 2048:
        return 512
    if n >= 512:
        return 256
    return 128


def _compiler_params(semantics):
    return pltpu.CompilerParams(
        dimension_semantics=semantics,
        vmem_limit_bytes=VMEM_LIMIT,
    )


# ---------------------------------------------------------------------------
# Pallas kernels
# ---------------------------------------------------------------------------
def _xw_kernel(x_ref, w_ref, o_ref):
    # Per-layer feature transform X @ W (bf16 in, f32 MXU accumulate, bf16 out).
    o_ref[...] = jnp.dot(
        x_ref[...], w_ref[...], preferred_element_type=jnp.float32
    ).astype(o_ref.dtype)


def _agg_bias_kernel(a_ref, xw_ref, b_ref, o_ref, acc_ref):
    # H = A_hat @ XW + b, tiled over (row tile i, reduction tile k).
    @pl.when(pl.program_id(1) == 0)
    def _init():
        acc_ref[...] = jnp.zeros_like(acc_ref)

    acc_ref[...] += jnp.dot(
        a_ref[...], xw_ref[...], preferred_element_type=jnp.float32
    )

    @pl.when(pl.program_id(1) == pl.num_programs(1) - 1)
    def _finalize():
        o_ref[...] = acc_ref[...] + b_ref[...]


def _bn_relu_kernel(h_ref, g_ref, beta_ref, o_ref, sum_ref, ssq_ref, stat_ref,
                    *, n_valid, tile_m):
    # Two-phase BatchNorm (batch statistics over the node axis) + ReLU.
    # phase 0: accumulate masked sum / sum-of-squares per row tile.
    # phase 1: normalize, scale/shift, ReLU, zero padded rows, store bf16.
    phase = pl.program_id(0)
    i = pl.program_id(1)

    rows = i * tile_m + jax.lax.broadcasted_iota(jnp.int32, h_ref.shape, 0)
    row_mask = (rows < n_valid).astype(jnp.float32)

    @pl.when(jnp.logical_and(phase == 0, i == 0))
    def _init():
        sum_ref[...] = jnp.zeros_like(sum_ref)
        ssq_ref[...] = jnp.zeros_like(ssq_ref)

    @pl.when(phase == 0)
    def _accumulate():
        h = h_ref[...] * row_mask
        sum_ref[...] += jnp.sum(h, axis=0, keepdims=True)
        ssq_ref[...] += jnp.sum(h * h, axis=0, keepdims=True)
        o_ref[...] = h.astype(o_ref.dtype)   # placeholder, overwritten in phase 1

    @pl.when(jnp.logical_and(phase == 0, i == pl.num_programs(1) - 1))
    def _stats():
        inv_n = 1.0 / float(n_valid)
        mean = sum_ref[...] * inv_n
        var = ssq_ref[...] * inv_n - mean * mean
        stat_ref[0:1, :] = mean
        stat_ref[1:2, :] = jax.lax.rsqrt(var + BN_EPS)

    @pl.when(phase == 1)
    def _normalize():
        mean = stat_ref[0:1, :]
        inv_std = stat_ref[1:2, :]
        hn = (h_ref[...] - mean) * inv_std * g_ref[...] + beta_ref[...]
        o_ref[...] = (jnp.maximum(hn, 0.0) * row_mask).astype(o_ref.dtype)


# ---------------------------------------------------------------------------
# pallas_call wrappers
# ---------------------------------------------------------------------------
def xw_matmul(x_pad, w_pad, tile_m):
    np_, c_in = x_pad.shape
    c_out = w_pad.shape[1]
    return pl.pallas_call(
        _xw_kernel,
        out_shape=jax.ShapeDtypeStruct((np_, c_out), jnp.bfloat16),
        grid=(np_ // tile_m,),
        in_specs=[
            pl.BlockSpec((tile_m, c_in), lambda i: (i, 0)),
            pl.BlockSpec((c_in, c_out), lambda i: (0, 0)),
        ],
        out_specs=pl.BlockSpec((tile_m, c_out), lambda i: (i, 0)),
        compiler_params=_compiler_params(("parallel",)),
    )(x_pad, w_pad)


def aggregate(a_pad, xw_pad, b_pad, tile_m, tile_k):
    np_ = a_pad.shape[0]
    c_out = xw_pad.shape[1]
    return pl.pallas_call(
        _agg_bias_kernel,
        out_shape=jax.ShapeDtypeStruct((np_, c_out), jnp.float32),
        grid=(np_ // tile_m, np_ // tile_k),
        in_specs=[
            pl.BlockSpec((tile_m, tile_k), lambda i, k: (i, k)),   # A_hat (bf16)
            pl.BlockSpec((tile_k, c_out), lambda i, k: (k, 0)),    # XW    (bf16)
            pl.BlockSpec((1, c_out), lambda i, k: (0, 0)),         # bias  (f32)
        ],
        out_specs=pl.BlockSpec((tile_m, c_out), lambda i, k: (i, 0)),
        scratch_shapes=[pltpu.VMEM((tile_m, c_out), jnp.float32)],
        compiler_params=_compiler_params(("parallel", "arbitrary")),
    )(a_pad, xw_pad, b_pad)


def batchnorm_relu(h_pad, gamma_pad, beta_pad, n_valid, tile_m):
    np_, c = h_pad.shape
    kernel = functools.partial(_bn_relu_kernel, n_valid=n_valid, tile_m=tile_m)
    return pl.pallas_call(
        kernel,
        out_shape=jax.ShapeDtypeStruct((np_, c), jnp.bfloat16),
        grid=(2, np_ // tile_m),
        in_specs=[
            pl.BlockSpec((tile_m, c), lambda p, i: (i, 0)),
            pl.BlockSpec((1, c), lambda p, i: (0, 0)),
            pl.BlockSpec((1, c), lambda p, i: (0, 0)),
        ],
        out_specs=pl.BlockSpec((tile_m, c), lambda p, i: (i, 0)),
        scratch_shapes=[
            pltpu.VMEM((1, c), jnp.float32),   # running sum
            pltpu.VMEM((1, c), jnp.float32),   # running sum of squares
            pltpu.VMEM((2, c), jnp.float32),   # [mean; inv_std]
        ],
        compiler_params=_compiler_params(("arbitrary", "arbitrary")),
    )(h_pad, gamma_pad, beta_pad)


# ---------------------------------------------------------------------------
# Graph preprocessing, params, forward
# ---------------------------------------------------------------------------
def normalized_adjacency(edge_index, num_nodes):
    # PyG gcn_norm: duplicate edges accumulate; self loops added only where
    # missing (add_remaining_self_loops); deg counted at the target node.
    src = edge_index[0]
    dst = edge_index[1]
    adj = jnp.zeros((num_nodes, num_nodes), jnp.float32)
    adj = adj.at[dst, src].add(1.0)
    diag = jnp.diagonal(adj)
    adj = adj + jnp.diag(jnp.where(diag == 0.0, 1.0, 0.0))
    deg = jnp.sum(adj, axis=1)
    dinv = jax.lax.rsqrt(jnp.maximum(deg, 1e-12))
    return adj * dinv[:, None] * dinv[None, :]


def prepare_graph(edge_index, num_nodes, tile_m):
    """Build the padded bf16 A_hat once; reusable across layers and calls."""
    a_hat = normalized_adjacency(edge_index, num_nodes)
    np_ = _round_up(num_nodes, tile_m)
    a_pad = jnp.zeros((np_, np_), jnp.bfloat16)
    return a_pad.at[:num_nodes, :num_nodes].set(a_hat.astype(jnp.bfloat16))


def init_params(key, in_channels, hidden_channels, num_layers):
    convs, bns = [], []
    dims_in = [in_channels] + [hidden_channels] * (num_layers - 1)
    for i in range(num_layers):
        key, wk = jax.random.split(key)
        fan_in, fan_out = dims_in[i], hidden_channels
        limit = jnp.sqrt(6.0 / (fan_in + fan_out))  # glorot, as in GCNConv
        w = jax.random.uniform(wk, (fan_in, fan_out), jnp.float32, -limit, limit)
        b = jnp.zeros((fan_out,), jnp.float32)
        convs.append((w, b))
    for _ in range(num_layers - 1):
        bns.append((jnp.ones((hidden_channels,), jnp.float32),
                    jnp.zeros((hidden_channels,), jnp.float32)))
    return {"convs": convs, "bns": bns}


def gcn_no_skips_forward(params, x, edge_index, a_pad=None):
    if x.ndim != 2:
        raise ValueError(
            f"Expected input is not a 2D tensor,instead it is a {x.ndim}D tensor.")
    n, c_in = x.shape
    tile_m = _row_tile(n)
    np_ = _round_up(n, tile_m)

    if a_pad is None:
        a_pad = prepare_graph(edge_index, n, tile_m)

    cp_in = _round_up(c_in, LANE)
    x_pad = jnp.zeros((np_, cp_in), jnp.float32).at[:n, :c_in].set(
        x.astype(jnp.float32))
    h = x_pad.astype(jnp.bfloat16)

    num_layers = len(params["convs"])
    for li, (w, b) in enumerate(params["convs"]):
        ci, co = w.shape
        cpi, cpo = _round_up(ci, LANE), _round_up(co, LANE)
        w_pad = jnp.zeros((cpi, cpo), jnp.bfloat16).at[:ci, :co].set(
            w.astype(jnp.bfloat16))
        b_pad = jnp.zeros((1, cpo), jnp.float32).at[0, :co].set(b)

        xw = xw_matmul(h, w_pad, tile_m)                     # bf16 [Np, cpo]
        h_agg = aggregate(a_pad, xw, b_pad, tile_m, tile_m)  # f32  [Np, cpo]

        if li < num_layers - 1:
            gamma, beta = params["bns"][li]
            g_pad = jnp.ones((1, cpo), jnp.float32).at[0, :co].set(gamma)
            be_pad = jnp.zeros((1, cpo), jnp.float32).at[0, :co].set(beta)
            h = batchnorm_relu(h_agg, g_pad, be_pad, n, tile_m)  # bf16
            # TODO(synk): nn.Dropout uses torch RNG in training mode; treated
            # as identity (eval semantics) here.
        else:
            h = h_agg

    out_c = params["convs"][-1][0].shape[1]
    return h[:n, :out_c]


# ---------------------------------------------------------------------------
# Pure-JAX reference (mirrors the kernel's bf16 streaming precision)
# ---------------------------------------------------------------------------
def _reference_forward(params, x, edge_index):
    n = x.shape[0]
    a_bf = normalized_adjacency(edge_index, n).astype(jnp.bfloat16)
    h = x.astype(jnp.bfloat16)
    num_layers = len(params["convs"])
    for li, (w, b) in enumerate(params["convs"]):
        xw = jnp.dot(h, w.astype(jnp.bfloat16),
                     preferred_element_type=jnp.float32).astype(jnp.bfloat16)
        hf = jnp.dot(a_bf, xw, preferred_element_type=jnp.float32) + b[None, :]
        if li < num_layers - 1:
            gamma, beta = params["bns"][li]
            mean = jnp.mean(hf, axis=0, keepdims=True)
            var = jnp.mean((hf - mean) ** 2, axis=0, keepdims=True)
            hf = ((hf - mean) * jax.lax.rsqrt(var + BN_EPS) * gamma[None, :]
                  + beta[None, :])
            h = jnp.maximum(hf, 0.0).astype(jnp.bfloat16)
        else:
            h = hf
    return h


if __name__ == "__main__":
    key = jax.random.PRNGKey(0)

    num_nodes = 16
    in_channels = 4
    hidden_channels = 32
    num_layers = 3
    num_edges = 32

    key, xk, ek = jax.random.split(key, 3)
    x = jax.random.normal(xk, (num_nodes, in_channels), jnp.float32)
    edge_index = jax.random.randint(ek, (2, num_edges), 0, num_nodes, jnp.int32)

    params = init_params(key, in_channels, hidden_channels, num_layers)

    forward = jax.jit(gcn_no_skips_forward)
    out = forward(params, x, edge_index)
    out = jax.block_until_ready(out)

    ref = _reference_forward(params, x, edge_index)
    assert out.shape == (num_nodes, hidden_channels)
    err = float(jnp.max(jnp.abs(out - ref)))
    assert jnp.allclose(out, ref, atol=1e-2, rtol=1e-2), (
        f"mismatch vs JAX reference (max abs err {err})")

    print("KERNEL_OK")
</pallas_src>

<mosaic_0001>
module attributes {stable_mosaic.version = 11 : i64} {
  func.func @_xw_kernel(%arg0: i32, %arg1: memref<128x128xbf16, #tpu.memory_space<vmem>>, %arg2: memref<128x128xbf16, #tpu.memory_space<vmem>>, %arg3: memref<128x128xbf16, #tpu.memory_space<vmem>>) attributes {dimension_semantics = [#tpu.dimension_semantics<parallel>], iteration_bounds = array<i64: 1>, scalar_prefetch = 0 : i64, scratch_operands = 0 : i64, tpu.core_type = #tpu.core_type<tc>, window_params = [{transform_indices = @transform_0, window_bounds = array<i64: 128, 128>}, {pipeline_mode = #tpu.pipeline_mode<synchronous>, transform_indices = @transform_1, window_bounds = array<i64: 128, 128>}, {transform_indices = @transform_2, window_bounds = array<i64: 128, 128>}]} {
    %c0 = arith.constant 0 : index
    %c0_0 = arith.constant 0 : index
    %0 = vector.load %arg1[%c0, %c0_0] : memref<128x128xbf16, #tpu.memory_space<vmem>>, vector<128x128xbf16>
    %c0_1 = arith.constant 0 : index
    %c0_2 = arith.constant 0 : index
    %1 = vector.load %arg2[%c0_1, %c0_2] : memref<128x128xbf16, #tpu.memory_space<vmem>>, vector<128x128xbf16>
    %cst = arith.constant dense<0.000000e+00> : vector<128x128xf32>
    %2 = tpu.matmul %0, %1, %cst {dimension_numbers = #tpu.dot_dimension_numbers<[1], [0], [0], [1], [0, 0, 1, 1], [], []>} : vector<128x128xbf16>, vector<128x128xbf16>, vector<128x128xf32> -> vector<128x128xf32>
    %3 = arith.truncf %2 : vector<128x128xf32> to vector<128x128xbf16>
    %c0_3 = arith.constant 0 : index
    %c0_4 = arith.constant 0 : index
    %4 = vector.load %arg3[%c0_3, %c0_4] : memref<128x128xbf16, #tpu.memory_space<vmem>>, vector<128x128xbf16>
    tpu.vector_store %arg3[%c0_3, %c0_4], %3 {strides = array<i32>} : memref<128x128xbf16, #tpu.memory_space<vmem>>, vector<128x128xbf16>,
    return
  }
  func.func @transform_0(%arg0: i32) -> (i32, i32) {
    %c0_i32 = arith.constant 0 : i32
    %c0_i32_0 = arith.constant 0 : i32
    return %arg0, %c0_i32 : i32, i32
  }
  func.func @transform_1(%arg0: i32) -> (i32, i32) {
    %c0_i32 = arith.constant 0 : i32
    %c0_i32_0 = arith.constant 0 : i32
    %c0_i32_1 = arith.constant 0 : i32
    return %c0_i32, %c0_i32_0 : i32, i32
  }
  func.func @transform_2(%arg0: i32) -> (i32, i32) {
    %c0_i32 = arith.constant 0 : i32
    %c0_i32_0 = arith.constant 0 : i32
    return %arg0, %c0_i32 : i32, i32
  }
}

module attributes {stable_mosaic.version = 11 : i64} {
  func.func @_agg_bias_kernel(%arg0: i32, %arg1: i32, %arg2: memref<128x128xbf16, #tpu.memory_space<vmem>>, %arg3: memref<128x128xbf16, #tpu.memory_space<vmem>>, %arg4: memref<1x128xf32, #tpu.memory_space<vmem>>, %arg5: memref<128x128xf32, #tpu.memory_space<vmem>>, %arg6: memref<128x128xf32, #tpu.memory_space<vmem>>) attributes {dimension_semantics = [#tpu.dimension_semantics<parallel>, #tpu.dimension_semantics<arbitrary>], iteration_bounds = array<i64: 1, 1>, scalar_prefetch = 0 : i64, scratch_operands = 1 : i64, tpu.core_type = #tpu.core_type<tc>, window_params = [{transform_indices = @transform_0, window_bounds = array<i64: 128, 128>}, {transform_indices = @transform_1, window_bounds = array<i64: 128, 128>}, {pipeline_mode = #tpu.pipeline_mode<synchronous>, transform_indices = @transform_2, window_bounds = array<i64: 1, 128>}, {transform_indices = @transform_3, window_bounds = array<i64: 128, 128>}]} {
    %c0_i32 = arith.constant 0 : i32
    %0 = arith.cmpi eq, %arg1, %c0_i32 : i32
    %1 = arith.extui %0 : i1 to i32
    %c0_i32_0 = arith.constant 0 : i32
    %2 = arith.cmpi ne, %1, %c0_i32_0 : i32
    scf.if %2 {
      %cst_10 = arith.constant 0.000000e+00 : f32
      %12 = vector.broadcast %cst_10 : f32 to vector<128x128xf32>
      %c0_11 = arith.constant 0 : index
      %c0_12 = arith.constant 0 : index
      %13 = vector.load %arg6[%c0_11, %c0_12] : memref<128x128xf32, #tpu.memory_space<vmem>>, vector<128x128xf32>
      tpu.vector_store %arg6[%c0_11, %c0_12], %12 {strides = array<i32>} : memref<128x128xf32, #tpu.memory_space<vmem>>, vector<128x128xf32>,
    } else {
    }
    %c0 = arith.constant 0 : index
    %c0_1 = arith.constant 0 : index
    %3 = vector.load %arg6[%c0, %c0_1] : memref<128x128xf32, #tpu.memory_space<vmem>>, vector<128x128xf32>
    %c0_2 = arith.constant 0 : index
    %c0_3 = arith.constant 0 : index
    %4 = vector.load %arg2[%c0_2, %c0_3] : memref<128x128xbf16, #tpu.memory_space<vmem>>, vector<128x128xbf16>
    %c0_4 = arith.constant 0 : index
    %c0_5 = arith.constant 0 : index
    %5 = vector.load %arg3[%c0_4, %c0_5] : memref<128x128xbf16, #tpu.memory_space<vmem>>, vector<128x128xbf16>
    %cst = arith.constant dense<0.000000e+00> : vector<128x128xf32>
    %6 = tpu.matmul %4, %5, %cst {dimension_numbers = #tpu.dot_dimension_numbers<[1], [0], [0], [1], [0, 0, 1, 1], [], []>} : vector<128x128xbf16>, vector<128x128xbf16>, vector<128x128xf32> -> vector<128x128xf32>
    %7 = arith.addf %3, %6 : vector<128x128xf32>
    %c0_6 = arith.constant 0 : index
    %c0_7 = arith.constant 0 : index
    %8 = vector.load %arg6[%c0_6, %c0_7] : memref<128x128xf32, #tpu.memory_space<vmem>>, vector<128x128xf32>
    tpu.vector_store %arg6[%c0_6, %c0_7], %7 {strides = array<i32>} : memref<128x128xf32, #tpu.memory_space<vmem>>, vector<128x128xf32>,
    %c0_i32_8 = arith.constant 0 : i32
    %9 = arith.cmpi eq, %arg1, %c0_i32_8 : i32
    %10 = arith.extui %9 : i1 to i32
    %c0_i32_9 = arith.constant 0 : i32
    %11 = arith.cmpi ne, %10, %c0_i32_9 : i32
    scf.if %11 {
      %c0_10 = arith.constant 0 : index
      %c0_11 = arith.constant 0 : index
      %12 = vector.load %arg6[%c0_10, %c0_11] : memref<128x128xf32, #tpu.memory_space<vmem>>, vector<128x128xf32>
      %c0_12 = arith.constant 0 : index
      %c0_13 = arith.constant 0 : index
      %13 = vector.load %arg4[%c0_12, %c0_13] : memref<1x128xf32, #tpu.memory_space<vmem>>, vector<1x128xf32>
      %14 = vector.broadcast %13 : vector<1x128xf32> to vector<128x128xf32>
      %15 = arith.addf %12, %14 : vector<128x128xf32>
      %c0_14 = arith.constant 0 : index
      %c0_15 = arith.constant 0 : index
      %16 = vector.load %arg5[%c0_14, %c0_15] : memref<128x128xf32, #tpu.memory_space<vmem>>, vector<128x128xf32>
      tpu.vector_store %arg5[%c0_14, %c0_15], %15 {strides = array<i32>} : memref<128x128xf32, #tpu.memory_space<vmem>>, vector<128x128xf32>,
    } else {
    }
    return
  }
  func.func @transform_0(%arg0: i32, %arg1: i32) -> (i32, i32) {
    %c0_i32 = arith.constant 0 : i32
    return %arg0, %arg1 : i32, i32
  }
  func.func @transform_1(%arg0: i32, %arg1: i32) -> (i32, i32) {
    %c0_i32 = arith.constant 0 : i32
    %c0_i32_0 = arith.constant 0 : i32
    return %arg1, %c0_i32 : i32, i32
  }
  func.func @transform_2(%arg0: i32, %arg1: i32) -> (i32, i32) {
    %c0_i32 = arith.constant 0 : i32
    %c0_i32_0 = arith.constant 0 : i32
    %c0_i32_1 = arith.constant 0 : i32
    return %c0_i32, %c0_i32_0 : i32, i32
  }
  func.func @transform_3(%arg0: i32, %arg1: i32) -> (i32, i32) {
    %c0_i32 = arith.constant 0 : i32
    %c0_i32_0 = arith.constant 0 : i32
    return %arg0, %c0_i32 : i32, i32
  }
}

module attributes {stable_mosaic.version = 11 : i64} {
  func.func @_bn_relu_kernel(%arg0: i32, %arg1: i32, %arg2: memref<128x128xf32, #tpu.memory_space<vmem>>, %arg3: memref<1x128xf32, #tpu.memory_space<vmem>>, %arg4: memref<1x128xf32, #tpu.memory_space<vmem>>, %arg5: memref<128x128xbf16, #tpu.memory_space<vmem>>, %arg6: memref<1x128xf32, #tpu.memory_space<vmem>>, %arg7: memref<1x128xf32, #tpu.memory_space<vmem>>, %arg8: memref<2x128xf32, #tpu.memory_space<vmem>>) attributes {dimension_semantics = [#tpu.dimension_semantics<arbitrary>, #tpu.dimension_semantics<arbitrary>], iteration_bounds = array<i64: 2, 1>, scalar_prefetch = 0 : i64, scratch_operands = 3 : i64, tpu.core_type = #tpu.core_type<tc>, window_params = [{transform_indices = @transform_0, window_bounds = array<i64: 128, 128>}, {pipeline_mode = #tpu.pipeline_mode<synchronous>, transform_indices = @transform_1, window_bounds = array<i64: 1, 128>}, {pipeline_mode = #tpu.pipeline_mode<synchronous>, transform_indices = @transform_2, window_bounds = array<i64: 1, 128>}, {transform_indices = @transform_3, window_bounds = array<i64: 128, 128>}]} {
    %c128_i32 = arith.constant 128 : i32
    %0 = arith.muli %arg1, %c128_i32 : i32
    %1 = tpu.iota {dimensions = array<i32: 0>} : vector<128x128xi32>
    %2 = vector.broadcast %0 : i32 to vector<128x128xi32>
    %3 = arith.addi %2, %1 : vector<128x128xi32>
    %c16_i32 = arith.constant 16 : i32
    %4 = vector.broadcast %c16_i32 : i32 to vector<128x128xi32>
    %5 = arith.cmpi slt, %3, %4 : vector<128x128xi32>
    %6 = arith.extui %5 : vector<128x128xi1> to vector<128x128xi32>
    %7 = arith.sitofp %6 : vector<128x128xi32> to vector<128x128xf32>
    %c0_i32 = arith.constant 0 : i32
    %8 = arith.cmpi eq, %arg0, %c0_i32 : i32
    %c0_i32_0 = arith.constant 0 : i32
    %9 = arith.cmpi eq, %arg1, %c0_i32_0 : i32
    %10 = arith.andi %8, %9 : i1
    %11 = arith.extui %10 : i1 to i32
    %c0_i32_1 = arith.constant 0 : i32
    %12 = arith.cmpi ne, %11, %c0_i32_1 : i32
    scf.if %12 {
      %cst = arith.constant 0.000000e+00 : f32
      %24 = vector.broadcast %cst : f32 to vector<1x128xf32>
      %c0 = arith.constant 0 : index
      %c0_8 = arith.constant 0 : index
      %25 = vector.load %arg6[%c0, %c0_8] : memref<1x128xf32, #tpu.memory_space<vmem>>, vector<1x128xf32>
      tpu.vector_store %arg6[%c0, %c0_8], %24 {strides = array<i32>} : memref<1x128xf32, #tpu.memory_space<vmem>>, vector<1x128xf32>,
      %cst_9 = arith.constant 0.000000e+00 : f32
      %26 = vector.broadcast %cst_9 : f32 to vector<1x128xf32>
      %c0_10 = arith.constant 0 : index
      %c0_11 = arith.constant 0 : index
      %27 = vector.load %arg7[%c0_10, %c0_11] : memref<1x128xf32, #tpu.memory_space<vmem>>, vector<1x128xf32>
      tpu.vector_store %arg7[%c0_10, %c0_11], %26 {strides = array<i32>} : memref<1x128xf32, #tpu.memory_space<vmem>>, vector<1x128xf32>,
    } else {
    }
    %c0_i32_2 = arith.constant 0 : i32
    %13 = arith.cmpi eq, %arg0, %c0_i32_2 : i32
    %14 = arith.extui %13 : i1 to i32
    %c0_i32_3 = arith.constant 0 : i32
    %15 = arith.cmpi ne, %14, %c0_i32_3 : i32
    scf.if %15 {
      %c0 = arith.constant 0 : index
      %c0_8 = arith.constant 0 : index
      %24 = vector.load %arg2[%c0, %c0_8] : memref<128x128xf32, #tpu.memory_space<vmem>>, vector<128x128xf32>
      %25 = arith.mulf %24, %7 : vector<128x128xf32>
      %c0_9 = arith.constant 0 : index
      %c0_10 = arith.constant 0 : index
      %26 = vector.load %arg6[%c0_9, %c0_10] : memref<1x128xf32, #tpu.memory_space<vmem>>, vector<1x128xf32>
      %cst = arith.constant dense<0.000000e+00> : vector<128xf32>
      %27 = vector.multi_reduction <add>, %25, %cst [0] : vector<128x128xf32> to vector<128xf32>
      %28 = vector.shape_cast %27 : vector<128xf32> to vector<1x128xf32>
      %29 = arith.addf %26, %28 : vector<1x128xf32>
      %c0_11 = arith.constant 0 : index
      %c0_12 = arith.constant 0 : index
      %30 = vector.load %arg6[%c0_11, %c0_12] : memref<1x128xf32, #tpu.memory_space<vmem>>, vector<1x128xf32>
      tpu.vector_store %arg6[%c0_11, %c0_12], %29 {strides = array<i32>} : memref<1x128xf32, #tpu.memory_space<vmem>>, vector<1x128xf32>,
      %c0_13 = arith.constant 0 : index
      %c0_14 = arith.constant 0 : index
      %31 = vector.load %arg7[%c0_13, %c0_14] : memref<1x128xf32, #tpu.memory_space<vmem>>, vector<1x128xf32>
      %32 = arith.mulf %25, %25 : vector<128x128xf32>
      %cst_15 = arith.constant dense<0.000000e+00> : vector<128xf32>
      %33 = vector.multi_reduction <add>, %32, %cst_15 [0] : vector<128x128xf32> to vector<128xf32>
      %34 = vector.shape_cast %33 : vector<128xf32> to vector<1x128xf32>
      %35 = arith.addf %31, %34 : vector<1x128xf32>
      %c0_16 = arith.constant 0 : index
      %c0_17 = arith.constant 0 : index
      %36 = vector.load %arg7[%c0_16, %c0_17] : memref<1x128xf32, #tpu.memory_space<vmem>>, vector<1x128xf32>
      tpu.vector_store %arg7[%c0_16, %c0_17], %35 {strides = array<i32>} : memref<1x128xf32, #tpu.memory_space<vmem>>, vector<1x128xf32>,
      %37 = arith.truncf %25 : vector<128x128xf32> to vector<128x128xbf16>
      %c0_18 = arith.constant 0 : index
      %c0_19 = arith.constant 0 : index
      %38 = vector.load %arg5[%c0_18, %c0_19] : memref<128x128xbf16, #tpu.memory_space<vmem>>, vector<128x128xbf16>
      tpu.vector_store %arg5[%c0_18, %c0_19], %37 {strides = array<i32>} : memref<128x128xbf16, #tpu.memory_space<vmem>>, vector<128x128xbf16>,
    } else {
    }
    %c0_i32_4 = arith.constant 0 : i32
    %16 = arith.cmpi eq, %arg0, %c0_i32_4 : i32
    %c0_i32_5 = arith.constant 0 : i32
    %17 = arith.cmpi eq, %arg1, %c0_i32_5 : i32
    %18 = arith.andi %16, %17 : i1
    %19 = arith.extui %18 : i1 to i32
    %c0_i32_6 = arith.constant 0 : i32
    %20 = arith.cmpi ne, %19, %c0_i32_6 : i32
    scf.if %20 {
      %c0 = arith.constant 0 : index
      %c0_8 = arith.constant 0 : index
      %24 = vector.load %arg6[%c0, %c0_8] : memref<1x128xf32, #tpu.memory_space<vmem>>, vector<1x128xf32>
      %cst = arith.constant 6.250000e-02 : f32
      %25 = vector.broadcast %cst : f32 to vector<1x128xf32>
      %26 = arith.mulf %24, %25 : vector<1x128xf32>
      %c0_9 = arith.constant 0 : index
      %c0_10 = arith.constant 0 : index
      %27 = vector.load %arg7[%c0_9, %c0_10] : memref<1x128xf32, #tpu.memory_space<vmem>>, vector<1x128xf32>
      %cst_11 = arith.constant 6.250000e-02 : f32
      %28 = vector.broadcast %cst_11 : f32 to vector<1x128xf32>
      %29 = arith.mulf %27, %28 : vector<1x128xf32>
      %30 = arith.mulf %26, %26 : vector<1x128xf32>
      %31 = arith.subf %29, %30 : vector<1x128xf32>
      %c0_12 = arith.constant 0 : index
      %c0_13 = arith.constant 0 : index
      %32 = vector.load %arg8[%c0_12, %c0_13] : memref<2x128xf32, #tpu.memory_space<vmem>>, vector<1x128xf32>
      tpu.vector_store %arg8[%c0_12, %c0_13], %26 {strides = array<i32>} : memref<2x128xf32, #tpu.memory_space<vmem>>, vector<1x128xf32>,
      %cst_14 = arith.constant 9.99999974E-6 : f32
      %33 = vector.broadcast %cst_14 : f32 to vector<1x128xf32>
      %34 = arith.addf %31, %33 : vector<1x128xf32>
      %35 = math.rsqrt %34 : vector<1x128xf32>
      %c1 = arith.constant 1 : index
      %c0_15 = arith.constant 0 : index
      %36 = vector.load %arg8[%c1, %c0_15] : memref<2x128xf32, #tpu.memory_space<vmem>>, vector<1x128xf32>
      tpu.vector_store %arg8[%c1, %c0_15], %35 {strides = array<i32>} : memref<2x128xf32, #tpu.memory_space<vmem>>, vector<1x128xf32>,
    } else {
    }
    %c1_i32 = arith.constant 1 : i32
    %21 = arith.cmpi eq, %arg0, %c1_i32 : i32
    %22 = arith.extui %21 : i1 to i32
    %c0_i32_7 = arith.constant 0 : i32
    %23 = arith.cmpi ne, %22, %c0_i32_7 : i32
    scf.if %23 {
      %c0 = arith.constant 0 : index
      %c0_8 = arith.constant 0 : index
      %24 = vector.load %arg8[%c0, %c0_8] : memref<2x128xf32, #tpu.memory_space<vmem>>, vector<1x128xf32>
      %c1 = arith.constant 1 : index
      %c0_9 = arith.constant 0 : index
      %25 = vector.load %arg8[%c1, %c0_9] : memref<2x128xf32, #tpu.memory_space<vmem>>, vector<1x128xf32>
      %c0_10 = arith.constant 0 : index
      %c0_11 = arith.constant 0 : index
      %26 = vector.load %arg2[%c0_10, %c0_11] : memref<128x128xf32, #tpu.memory_space<vmem>>, vector<128x128xf32>
      %27 = vector.broadcast %24 : vector<1x128xf32> to vector<128x128xf32>
      %28 = arith.subf %26, %27 : vector<128x128xf32>
      %29 = vector.broadcast %25 : vector<1x128xf32> to vector<128x128xf32>
      %30 = arith.mulf %28, %29 : vector<128x128xf32>
      %c0_12 = arith.constant 0 : index
      %c0_13 = arith.constant 0 : index
      %31 = vector.load %arg3[%c0_12, %c0_13] : memref<1x128xf32, #tpu.memory_space<vmem>>, vector<1x128xf32>
      %32 = vector.broadcast %31 : vector<1x128xf32> to vector<128x128xf32>
      %33 = arith.mulf %30, %32 : vector<128x128xf32>
      %c0_14 = arith.constant 0 : index
      %c0_15 = arith.constant 0 : index
      %34 = vector.load %arg4[%c0_14, %c0_15] : memref<1x128xf32, #tpu.memory_space<vmem>>, vector<1x128xf32>
      %35 = vector.broadcast %34 : vector<1x128xf32> to vector<128x128xf32>
      %36 = arith.addf %33, %35 : vector<128x128xf32>
      %cst = arith.constant 0.000000e+00 : f32
      %37 = vector.broadcast %cst : f32 to vector<128x128xf32>
      %38 = arith.maximumf %36, %37 : vector<128x128xf32>
      %39 = arith.mulf %38, %7 : vector<128x128xf32>
      %40 = arith.truncf %39 : vector<128x128xf32> to vector<128x128xbf16>
      %c0_16 = arith.constant 0 : index
      %c0_17 = arith.constant 0 : index
      %41 = vector.load %arg5[%c0_16, %c0_17] : memref<128x128xbf16, #tpu.memory_space<vmem>>, vector<128x128xbf16>
      tpu.vector_store %arg5[%c0_16, %c0_17], %40 {strides = array<i32>} : memref<128x128xbf16, #tpu.memory_space<vmem>>, vector<128x128xbf16>,
    } else {
    }
    return
  }
  func.func @transform_0(%arg0: i32, %arg1: i32) -> (i32, i32) {
    %c0_i32 = arith.constant 0 : i32
    %c0_i32_0 = arith.constant 0 : i32
    return %arg1, %c0_i32 : i32, i32
  }
  func.func @transform_1(%arg0: i32, %arg1: i32) -> (i32, i32) {
    %c0_i32 = arith.constant 0 : i32
    %c0_i32_0 = arith.constant 0 : i32
    %c0_i32_1 = arith.constant 0 : i32
    return %c0_i32, %c0_i32_0 : i32, i32
  }
  func.func @transform_2(%arg0: i32, %arg1: i32) -> (i32, i32) {
    %c0_i32 = arith.constant 0 : i32
    %c0_i32_0 = arith.constant 0 : i32
    %c0_i32_1 = arith.constant 0 : i32
    return %c0_i32, %c0_i32_0 : i32, i32
  }
  func.func @transform_3(%arg0: i32, %arg1: i32) -> (i32, i32) {
    %c0_i32 = arith.constant 0 : i32
    %c0_i32_0 = arith.constant 0 : i32
    return %arg1, %c0_i32 : i32, i32
  }
}

</mosaic_0001>

<llo_original>
// kernel: gcn_no_skips_forward.8
$region0: #{gcn_no_skips_forward.8}
  #allocation0 [shape = 'u32[]', space=smem, size = 0x4, offset = 0x4, fixed_abs, tag = 'smem constant byte address 0x4 - core index']
  #allocation1 [shape = 'u32[72,128]{1,0:T(1,128)}', space=vmem, size = 0x9000, scoped, tag = 'internal scratch']
  %s0 = inlined_call_operand.vmem [shape: bf16[128,128], index: 0, kind: input, shape index: {}]
  %s1 = inlined_call_operand.vmem [shape: bf16[128,128], index: 1, kind: input, shape index: {}]
  %s2 = inlined_call_operand.vmem [shape: bf16[128,128], index: 2, kind: output, shape index: {}]
  %s3 = sld [smem:[#allocation0]]
  $region18: #{gcn_no_skips_forward.8} parent=0
    _
  %s5 = ssub.s32 1, %s3
  %s6 = scalar_select 0, %s5, %s3
  // Predicated region
  $region2: #{gcn_no_skips_forward.8} parent=0 // pred_check
    _
  $region3: #{gcn_no_skips_forward.8} parent=0 // pred_check_branch
    %8 = sbr.rel (0) target = $region5
  $region4: #{gcn_no_skips_forward.8} parent=0 // pred_region
    _
  $region5: #{gcn_no_skips_forward.8} parent=0 // pred_fallthru
    _
  // Predicated region
  $region6: #{gcn_no_skips_forward.8} parent=0 // pred_check
    _
  $region7: #{gcn_no_skips_forward.8} parent=0 // pred_check_branch
    %10 = sbr.rel (0) target = $region9
  $region8: #{gcn_no_skips_forward.8} parent=0 // pred_region
    _
  $region9: #{gcn_no_skips_forward.8} parent=0 // pred_fallthru
    _
  %v11 = vld [vmem:[%s0] sm:$0xf]
  %v12 = vld [vmem:[%s0 + $0x4] sm:$0xf]
  %v13 = vld [vmem:[%s0 + $0x8] sm:$0xf]
  %v14 = vld [vmem:[%s0 + $0xc] sm:$0xf]
  %v15 = vld [vmem:[%s0 + $0x10] sm:$0xf]
  %v16 = vld [vmem:[%s0 + $0x14] sm:$0xf]
  %v17 = vld [vmem:[%s0 + $0x18] sm:$0xf]
  %v18 = vld [vmem:[%s0 + $0x1c] sm:$0xf]
  %v19 = vld [vmem:[%s0 + $0x20] sm:$0xf]
  %v20 = vld [vmem:[%s0 + $0x24] sm:$0xf]
  %v21 = vld [vmem:[%s0 + $0x28] sm:$0xf]
  %v22 = vld [vmem:[%s0 + $0x2c] sm:$0xf]
  %v23 = vld [vmem:[%s0 + $0x30] sm:$0xf]
  %v24 = vld [vmem:[%s0 + $0x34] sm:$0xf]
  %v25 = vld [vmem:[%s0 + $0x38] sm:$0xf]
  %v26 = vld [vmem:[%s0 + $0x3c] sm:$0xf]
  %v27 = vld [vmem:[%s1] sm:$0xf]
  %v28 = vld [vmem:[%s1 + $0x4] sm:$0xf]
  %v29 = vld [vmem:[%s1 + $0x8] sm:$0xf]
  %v30 = vld [vmem:[%s1 + $0xc] sm:$0xf]
  %v31 = vld [vmem:[%s1 + $0x10] sm:$0xf]
  %v32 = vld [vmem:[%s1 + $0x14] sm:$0xf]
  %v33 = vld [vmem:[%s1 + $0x18] sm:$0xf]
  %v34 = vld [vmem:[%s1 + $0x1c] sm:$0xf]
  %v35 = vld [vmem:[%s1 + $0x20] sm:$0xf]
  %v36 = vld [vmem:[%s1 + $0x24] sm:$0xf]
  %v37 = vld [vmem:[%s1 + $0x28] sm:$0xf]
  %v38 = vld [vmem:[%s1 + $0x2c] sm:$0xf]
  %v39 = vld [vmem:[%s1 + $0x30] sm:$0xf]
  %v40 = vld [vmem:[%s1 + $0x34] sm:$0xf]
  %v41 = vld [vmem:[%s1 + $0x38] sm:$0xf]
  %v42 = vld [vmem:[%s1 + $0x3c] sm:$0xf]
  %v59 = vunpack.c.l.b16 %v11
  %v60 = vunpack.c.l.b16 %v12
  %v61 = vunpack.c.l.b16 %v13
  %v62 = vunpack.c.l.b16 %v14
  %v63 = vunpack.c.l.b16 %v15
  %v64 = vunpack.c.l.b16 %v16
  %v65 = vunpack.c.l.b16 %v17
  %v66 = vunpack.c.l.b16 %v18
  %v67 = vunpack.c.l.b16 %v19
  %v68 = vunpack.c.l.b16 %v20
  %v69 = vunpack.c.l.b16 %v21
  %v70 = vunpack.c.l.b16 %v22
  %v71 = vunpack.c.l.b16 %v23
  %v72 = vunpack.c.l.b16 %v24
  %v73 = vunpack.c.l.b16 %v25
  %v74 = vunpack.c.l.b16 %v26
  %v75 = vpack.c.b16 %v60, %v59
  %v76 = vpack.c.b16 %v62, %v61
  %v77 = vpack.c.b16 %v64, %v63
  %v78 = vpack.c.b16 %v66, %v65
  %v79 = vpack.c.b16 %v68, %v67
  %v80 = vpack.c.b16 %v70, %v69
  %v81 = vpack.c.b16 %v72, %v71
  %v82 = vpack.c.b16 %v74, %v73
  %v107 = vunpack.c.l.b16 %v27
  %v108 = vunpack.c.l.b16 %v28
  %v109 = vunpack.c.l.b16 %v29
  %v110 = vunpack.c.l.b16 %v30
  %v111 = vunpack.c.l.b16 %v31
  %v112 = vunpack.c.l.b16 %v32
  %v113 = vunpack.c.l.b16 %v33
  %v114 = vunpack.c.l.b16 %v34
  %v115 = vunpack.c.l.b16 %v35
  %v116 = vunpack.c.l.b16 %v36
  %v117 = vunpack.c.l.b16 %v37
  %v118 = vunpack.c.l.b16 %v38
  %v119 = vunpack.c.l.b16 %v39
  %v120 = vunpack.c.l.b16 %v40
  %v121 = vunpack.c.l.b16 %v41
  %v122 = vunpack.c.l.b16 %v42
  %v123 = vpack.c.b16 %v108, %v107
  %v124 = vpack.c.b16 %v110, %v109
  %v125 = vpack.c.b16 %v112, %v111
  %v126 = vpack.c.b16 %v114, %v113
  %v127 = vpack.c.b16 %v116, %v115
  %v128 = vpack.c.b16 %v118, %v117
  %v129 = vpack.c.b16 %v120, %v119
  %v130 = vpack.c.b16 %v122, %v121
  %139 = vmatpush.bf16.msra.mxu0 %v130
  %140 = vmatpush.bf16.msra.mxu0 %v129
  %141 = vmatpush.bf16.msra.mxu0 %v128
  %142 = vmatpush.bf16.msra.mxu0 %v127
  %143 = vmatpush.bf16.msra.mxu0 %v126
  %144 = vmatpush.bf16.msra.mxu0 %v125
  %145 = vmatpush.bf16.msra.mxu0 %v124
  %146 = vmatpush.bf16.msra.mxu0 %v123
  %147 = vmatmul.bf16.gmra.mxu0 %v75
  %v148 = vpop.f32.mrf.mxu0
  %v149 = vadd.f32 0.0, %v148
  %v150 = vpop.f32.mrf.mxu0
  %v151 = vadd.f32 0.0, %v150
  %152 = vmatmul.bf16.gmra.mxu0 %v76
  %v153 = vpop.f32.mrf.mxu0
  %v154 = vadd.f32 0.0, %v153
  %v155 = vpop.f32.mrf.mxu0
  %v156 = vadd.f32 0.0, %v155
  %157 = vmatmul.bf16.gmra.mxu0 %v77
  %v158 = vpop.f32.mrf.mxu0
  %v159 = vadd.f32 0.0, %v158
  %v160 = vpop.f32.mrf.mxu0
  %v161 = vadd.f32 0.0, %v160
  %162 = vmatmul.bf16.gmra.mxu0 %v78
  %v163 = vpop.f32.mrf.mxu0
  %v164 = vadd.f32 0.0, %v163
  %v165 = vpop.f32.mrf.mxu0
  %v166 = vadd.f32 0.0, %v165
  %167 = vmatmul.bf16.gmra.mxu0 %v79
  %v168 = vpop.f32.mrf.mxu0
  %v169 = vadd.f32 0.0, %v168
  %v170 = vpop.f32.mrf.mxu0
  %v171 = vadd.f32 0.0, %v170
  %172 = vmatmul.bf16.gmra.mxu0 %v80
  %v173 = vpop.f32.mrf.mxu0
  %v174 = vadd.f32 0.0, %v173
  %v175 = vpop.f32.mrf.mxu0
  %v176 = vadd.f32 0.0, %v175
  %177 = vmatmul.bf16.gmra.mxu0 %v81
  %v178 = vpop.f32.mrf.mxu0
  %v179 = vadd.f32 0.0, %v178
  %v180 = vpop.f32.mrf.mxu0
  %v181 = vadd.f32 0.0, %v180
  %182 = vmatmul.bf16.gmra.mxu0 %v82
  %v183 = vpop.f32.mrf.mxu0
  %v184 = vadd.f32 0.0, %v183
  %v185 = vpop.f32.mrf.mxu0
  %v186 = vadd.f32 0.0, %v185
  %187 = vdwg.mxu0
  %v188 = vpack.c.bf16 %v149, %v149
  %v189 = vpack.c.bf16 %v151, %v151
  %v190 = vpack.c.bf16 %v154, %v154
  %v191 = vpack.c.bf16 %v156, %v156
  %v192 = vpack.c.bf16 %v159, %v159
  %v193 = vpack.c.bf16 %v161, %v161
  %v194 = vpack.c.bf16 %v164, %v164
  %v195 = vpack.c.bf16 %v166, %v166
  %v196 = vpack.c.bf16 %v169, %v169
  %v197 = vpack.c.bf16 %v171, %v171
  %v198 = vpack.c.bf16 %v174, %v174
  %v199 = vpack.c.bf16 %v176, %v176
  %v200 = vpack.c.bf16 %v179, %v179
  %v201 = vpack.c.bf16 %v181, %v181
  %v202 = vpack.c.bf16 %v184, %v184
  %v203 = vpack.c.bf16 %v186, %v186
  %204 = vst [vmem:[%s2] sm:$0xf] %v188
  %205 = vst [vmem:[%s2 + $0x4] sm:$0xf] %v189
  %206 = vst [vmem:[%s2 + $0x8] sm:$0xf] %v190
  %207 = vst [vmem:[%s2 + $0xc] sm:$0xf] %v191
  %208 = vst [vmem:[%s2 + $0x10] sm:$0xf] %v192
  %209 = vst [vmem:[%s2 + $0x14] sm:$0xf] %v193
  %210 = vst [vmem:[%s2 + $0x18] sm:$0xf] %v194
  %211 = vst [vmem:[%s2 + $0x1c] sm:$0xf] %v195
  %212 = vst [vmem:[%s2 + $0x20] sm:$0xf] %v196
  %213 = vst [vmem:[%s2 + $0x24] sm:$0xf] %v197
  %214 = vst [vmem:[%s2 + $0x28] sm:$0xf] %v198
  %215 = vst [vmem:[%s2 + $0x2c] sm:$0xf] %v199
  %216 = vst [vmem:[%s2 + $0x30] sm:$0xf] %v200
  %217 = vst [vmem:[%s2 + $0x34] sm:$0xf] %v201
  %218 = vst [vmem:[%s2 + $0x38] sm:$0xf] %v202
  %219 = vst [vmem:[%s2 + $0x3c] sm:$0xf] %v203
  // Predicated region
  $region10: #{gcn_no_skips_forward.8} parent=0 // pred_check
    _
  $region11: #{gcn_no_skips_forward.8} parent=0 // pred_check_branch
    %221 = sbr.rel (0) target = $region13
  $region12: #{gcn_no_skips_forward.8} parent=0 // pred_region
    _
  $region13: #{gcn_no_skips_forward.8} parent=0 // pred_fallthru
    _
  // Predicated region
  $region14: #{gcn_no_skips_forward.8} parent=0 // pred_check
    _
  $region15: #{gcn_no_skips_forward.8} parent=0 // pred_check_branch
    %223 = sbr.rel (0) target = $region17
  $region16: #{gcn_no_skips_forward.8} parent=0 // pred_region
    _
  $region17: #{gcn_no_skips_forward.8} parent=0 // pred_fallthru
    _

// kernel: gcn_no_skips_forward.9
$region0: #{gcn_no_skips_forward.9}
  #allocation0 [shape = 'u32[]', space=smem, size = 0x4, offset = 0x4, fixed_abs, tag = 'smem constant byte address 0x4 - core index']
  #allocation1 [shape = 'u32[72,128]{1,0:T(1,128)}', space=vmem, size = 0x9000, scoped, tag = 'internal scratch']
  #allocation2 [shape = 'f32[128,128]{1,0:T(8,128)}', space=vmem, size = 0x10000, scoped, tag = 'scratch operand']
  %s0 = inlined_call_operand.vmem [shape: bf16[128,128], index: 0, kind: input, shape index: {}]
  %s1 = inlined_call_operand.vmem [shape: bf16[128,128], index: 1, kind: input, shape index: {}]
  %s2 = inlined_call_operand.vmem [shape: f32[1,128], index: 2, kind: input, shape index: {}]
  %s3 = inlined_call_operand.vmem [shape: f32[128,128], index: 3, kind: output, shape index: {}]
  %s4 = sld [smem:[#allocation0]]
  $region30: #{gcn_no_skips_forward.9} parent=0
    _
  %s6 = ssub.s32 1, %s4
  %s7 = scalar_select 0, %s6, %s4
  // Predicated region
  $region2: #{gcn_no_skips_forward.9} parent=0 // pred_check
    _
  $region3: #{gcn_no_skips_forward.9} parent=0 // pred_check_branch
    %9 = sbr.rel (0) target = $region5
  $region4: #{gcn_no_skips_forward.9} parent=0 // pred_region
    _
  $region5: #{gcn_no_skips_forward.9} parent=0 // pred_fallthru
    _
  // Predicated region
  $region6: #{gcn_no_skips_forward.9} parent=0 // pred_check
    _
  $region7: #{gcn_no_skips_forward.9} parent=0 // pred_check_branch
    %11 = sbr.rel (0) target = $region9
  $region8: #{gcn_no_skips_forward.9} parent=0 // pred_region
    _
  $region9: #{gcn_no_skips_forward.9} parent=0 // pred_fallthru
    _
  // Predicated region
  $region10: #{gcn_no_skips_forward.9} parent=0 // pred_check
    _
  $region11: #{gcn_no_skips_forward.9} parent=0 // pred_check_branch
    %13 = sbr.rel (0) target = $region13
  $region12: #{gcn_no_skips_forward.9} parent=0 // pred_region
    _
  $region13: #{gcn_no_skips_forward.9} parent=0 // pred_fallthru
    _
  %p14 = scmp.eq.s32.totalorder 0, 0
  // Predicated region
  $region14: #{gcn_no_skips_forward.9} parent=0 // pred_check
    %p15 = pneg %p14
  $region15: #{gcn_no_skips_forward.9} parent=0 // pred_check_branch
    %17 = sbr.rel (%p15) target = $region17
  $region16: #{gcn_no_skips_forward.9} parent=0 // pred_region
    %18 = vst [vmem:[#allocation2] sm:$0xff] 0.0
    %19 = vst [vmem:[#allocation2 + $0x8] sm:$0xff] 0.0
    %20 = vst [vmem:[#allocation2 + $0x10] sm:$0xff] 0.0
    %21 = vst [vmem:[#allocation2 + $0x18] sm:$0xff] 0.0
    %22 = vst [vmem:[#allocation2 + $0x20] sm:$0xff] 0.0
    %23 = vst [vmem:[#allocation2 + $0x28] sm:$0xff] 0.0
    %24 = vst [vmem:[#allocation2 + $0x30] sm:$0xff] 0.0
    %25 = vst [vmem:[#allocation2 + $0x38] sm:$0xff] 0.0
    %26 = vst [vmem:[#allocation2 + $0x40] sm:$0xff] 0.0
    %27 = vst [vmem:[#allocation2 + $0x48] sm:$0xff] 0.0
    %28 = vst [vmem:[#allocation2 + $0x50] sm:$0xff] 0.0
    %29 = vst [vmem:[#allocation2 + $0x58] sm:$0xff] 0.0
    %30 = vst [vmem:[#allocation2 + $0x60] sm:$0xff] 0.0
    %31 = vst [vmem:[#allocation2 + $0x68] sm:$0xff] 0.0
    %32 = vst [vmem:[#allocation2 + $0x70] sm:$0xff] 0.0
    %33 = vst [vmem:[#allocation2 + $0x78] sm:$0xff] 0.0
  $region17: #{gcn_no_skips_forward.9} parent=0 // pred_fallthru
    _
  %v34 = vld [vmem:[#allocation2] sm:$0xff]
  %v35 = vld [vmem:[#allocation2 + $0x8] sm:$0xff]
  %v36 = vld [vmem:[#allocation2 + $0x10] sm:$0xff]
  %v37 = vld [vmem:[#allocation2 + $0x18] sm:$0xff]
  %v38 = vld [vmem:[#allocation2 + $0x20] sm:$0xff]
  %v39 = vld [vmem:[#allocation2 + $0x28] sm:$0xff]
  %v40 = vld [vmem:[#allocation2 + $0x30] sm:$0xff]
  %v41 = vld [vmem:[#allocation2 + $0x38] sm:$0xff]
  %v42 = vld [vmem:[#allocation2 + $0x40] sm:$0xff]
  %v43 = vld [vmem:[#allocation2 + $0x48] sm:$0xff]
  %v44 = vld [vmem:[#allocation2 + $0x50] sm:$0xff]
  %v45 = vld [vmem:[#allocation2 + $0x58] sm:$0xff]
  %v46 = vld [vmem:[#allocation2 + $0x60] sm:$0xff]
  %v47 = vld [vmem:[#allocation2 + $0x68] sm:$0xff]
  %v48 = vld [vmem:[#allocation2 + $0x70] sm:$0xff]
  %v49 = vld [vmem:[#allocation2 + $0x78] sm:$0xff]
  %v50 = vld [vmem:[%s0] sm:$0xf]
  %v51 = vld [vmem:[%s0 + $0x4] sm:$0xf]
  %v52 = vld [vmem:[%s0 + $0x8] sm:$0xf]
  %v53 = vld [vmem:[%s0 + $0xc] sm:$0xf]
  %v54 = vld [vmem:[%s0 + $0x10] sm:$0xf]
  %v55 = vld [vmem:[%s0 + $0x14] sm:$0xf]
  %v56 = vld [vmem:[%s0 + $0x18] sm:$0xf]
  %v57 = vld [vmem:[%s0 + $0x1c] sm:$0xf]
  %v58 = vld [vmem:[%s0 + $0x20] sm:$0xf]
  %v59 = vld [vmem:[%s0 + $0x24] sm:$0xf]
  %v60 = vld [vmem:[%s0 + $0x28] sm:$0xf]
  %v61 = vld [vmem:[%s0 + $0x2c] sm:$0xf]
  %v62 = vld [vmem:[%s0 + $0x30] sm:$0xf]
  %v63 = vld [vmem:[%s0 + $0x34] sm:$0xf]
  %v64 = vld [vmem:[%s0 + $0x38] sm:$0xf]
  %v65 = vld [vmem:[%s0 + $0x3c] sm:$0xf]
  %v66 = vld [vmem:[%s1] sm:$0xf]
  %v67 = vld [vmem:[%s1 + $0x4] sm:$0xf]
  %v68 = vld [vmem:[%s1 + $0x8] sm:$0xf]
  %v69 = vld [vmem:[%s1 + $0xc] sm:$0xf]
  %v70 = vld [vmem:[%s1 + $0x10] sm:$0xf]
  %v71 = vld [vmem:[%s1 + $0x14] sm:$0xf]
  %v72 = vld [vmem:[%s1 + $0x18] sm:$0xf]
  %v73 = vld [vmem:[%s1 + $0x1c] sm:$0xf]
  %v74 = vld [vmem:[%s1 + $0x20] sm:$0xf]
  %v75 = vld [vmem:[%s1 + $0x24] sm:$0xf]
  %v76 = vld [vmem:[%s1 + $0x28] sm:$0xf]
  %v77 = vld [vmem:[%s1 + $0x2c] sm:$0xf]
  %v78 = vld [vmem:[%s1 + $0x30] sm:$0xf]
  %v79 = vld [vmem:[%s1 + $0x34] sm:$0xf]
  %v80 = vld [vmem:[%s1 + $0x38] sm:$0xf]
  %v81 = vld [vmem:[%s1 + $0x3c] sm:$0xf]
  %v98 = vunpack.c.l.b16 %v50
  %v99 = vunpack.c.l.b16 %v51
  %v100 = vunpack.c.l.b16 %v52
  %v101 = vunpack.c.l.b16 %v53
  %v102 = vunpack.c.l.b16 %v54
  %v103 = vunpack.c.l.b16 %v55
  %v104 = vunpack.c.l.b16 %v56
  %v105 = vunpack.c.l.b16 %v57
  %v106 = vunpack.c.l.b16 %v58
  %v107 = vunpack.c.l.b16 %v59
  %v108 = vunpack.c.l.b16 %v60
  %v109 = vunpack.c.l.b16 %v61
  %v110 = vunpack.c.l.b16 %v62
  %v111 = vunpack.c.l.b16 %v63
  %v112 = vunpack.c.l.b16 %v64
  %v113 = vunpack.c.l.b16 %v65
  %v114 = vpack.c.b16 %v99, %v98
  %v115 = vpack.c.b16 %v101, %v100
  %v116 = vpack.c.b16 %v103, %v102
  %v117 = vpack.c.b16 %v105, %v104
  %v118 = vpack.c.b16 %v107, %v106
  %v119 = vpack.c.b16 %v109, %v108
  %v120 = vpack.c.b16 %v111, %v110
  %v121 = vpack.c.b16 %v113, %v112
  %v146 = vunpack.c.l.b16 %v66
  %v147 = vunpack.c.l.b16 %v67
  %v148 = vunpack.c.l.b16 %v68
  %v149 = vunpack.c.l.b16 %v69
  %v150 = vunpack.c.l.b16 %v70
  %v151 = vunpack.c.l.b16 %v71
  %v152 = vunpack.c.l.b16 %v72
  %v153 = vunpack.c.l.b16 %v73
  %v154 = vunpack.c.l.b16 %v74
  %v155 = vunpack.c.l.b16 %v75
  %v156 = vunpack.c.l.b16 %v76
  %v157 = vunpack.c.l.b16 %v77
  %v158 = vunpack.c.l.b16 %v78
  %v159 = vunpack.c.l.b16 %v79
  %v160 = vunpack.c.l.b16 %v80
  %v161 = vunpack.c.l.b16 %v81
  %v162 = vpack.c.b16 %v147, %v146
  %v163 = vpack.c.b16 %v149, %v148
  %v164 = vpack.c.b16 %v151, %v150
  %v165 = vpack.c.b16 %v153, %v152
  %v166 = vpack.c.b16 %v155, %v154
  %v167 = vpack.c.b16 %v157, %v156
  %v168 = vpack.c.b16 %v159, %v158
  %v169 = vpack.c.b16 %v161, %v160
  %178 = vmatpush.bf16.msra.mxu0 %v169
  %179 = vmatpush.bf16.msra.mxu0 %v168
  %180 = vmatpush.bf16.msra.mxu0 %v167
  %181 = vmatpush.bf16.msra.mxu0 %v166
  %182 = vmatpush.bf16.msra.mxu0 %v165
  %183 = vmatpush.bf16.msra.mxu0 %v164
  %184 = vmatpush.bf16.msra.mxu0 %v163
  %185 = vmatpush.bf16.msra.mxu0 %v162
  %186 = vmatmul.bf16.gmra.mxu0 %v114
  %v187 = vpop.f32.mrf.mxu0
  %v188 = vadd.f32 0.0, %v187
  %v189 = vpop.f32.mrf.mxu0
  %v190 = vadd.f32 0.0, %v189
  %191 = vmatmul.bf16.gmra.mxu0 %v115
  %v192 = vpop.f32.mrf.mxu0
  %v193 = vadd.f32 0.0, %v192
  %v194 = vpop.f32.mrf.mxu0
  %v195 = vadd.f32 0.0, %v194
  %196 = vmatmul.bf16.gmra.mxu0 %v116
  %v197 = vpop.f32.mrf.mxu0
  %v198 = vadd.f32 0.0, %v197
  %v199 = vpop.f32.mrf.mxu0
  %v200 = vadd.f32 0.0, %v199
  %201 = vmatmul.bf16.gmra.mxu0 %v117
  %v202 = vpop.f32.mrf.mxu0
  %v203 = vadd.f32 0.0, %v202
  %v204 = vpop.f32.mrf.mxu0
  %v205 = vadd.f32 0.0, %v204
  %206 = vmatmul.bf16.gmra.mxu0 %v118
  %v207 = vpop.f32.mrf.mxu0
  %v208 = vadd.f32 0.0, %v207
  %v209 = vpop.f32.mrf.mxu0
  %v210 = vadd.f32 0.0, %v209
  %211 = vmatmul.bf16.gmra.mxu0 %v119
  %v212 = vpop.f32.mrf.mxu0
  %v213 = vadd.f32 0.0, %v212
  %v214 = vpop.f32.mrf.mxu0
  %v215 = vadd.f32 0.0, %v214
  %216 = vmatmul.bf16.gmra.mxu0 %v120
  %v217 = vpop.f32.mrf.mxu0
  %v218 = vadd.f32 0.0, %v217
  %v219 = vpop.f32.mrf.mxu0
  %v220 = vadd.f32 0.0, %v219
  %221 = vmatmul.bf16.gmra.mxu0 %v121
  %v222 = vpop.f32.mrf.mxu0
  %v223 = vadd.f32 0.0, %v222
  %v224 = vpop.f32.mrf.mxu0
  %v225 = vadd.f32 0.0, %v224
  %226 = vdwg.mxu0
  %v227 = vadd.f32 %v34, %v188
  %v228 = vadd.f32 %v35, %v190
  %v229 = vadd.f32 %v36, %v193
  %v230 = vadd.f32 %v37, %v195
  %v231 = vadd.f32 %v38, %v198
  %v232 = vadd.f32 %v39, %v200
  %v233 = vadd.f32 %v40, %v203
  %v234 = vadd.f32 %v41, %v205
  %v235 = vadd.f32 %v42, %v208
  %v236 = vadd.f32 %v43, %v210
  %v237 = vadd.f32 %v44, %v213
  %v238 = vadd.f32 %v45, %v215
  %v239 = vadd.f32 %v46, %v218
  %v240 = vadd.f32 %v47, %v220
  %v241 = vadd.f32 %v48, %v223
  %v242 = vadd.f32 %v49, %v225
  %243 = vst [vmem:[#allocation2] sm:$0xff] %v227
  %244 = vst [vmem:[#allocation2 + $0x8] sm:$0xff] %v228
  %245 = vst [vmem:[#allocation2 + $0x10] sm:$0xff] %v229
  %246 = vst [vmem:[#allocation2 + $0x18] sm:$0xff] %v230
  %247 = vst [vmem:[#allocation2 + $0x20] sm:$0xff] %v231
  %248 = vst [vmem:[#allocation2 + $0x28] sm:$0xff] %v232
  %249 = vst [vmem:[#allocation2 + $0x30] sm:$0xff] %v233
  %250 = vst [vmem:[#allocation2 + $0x38] sm:$0xff] %v234
  %251 = vst [vmem:[#allocation2 + $0x40] sm:$0xff] %v235
  %252 = vst [vmem:[#allocation2 + $0x48] sm:$0xff] %v236
  %253 = vst [vmem:[#allocation2 + $0x50] sm:$0xff] %v237
  %254 = vst [vmem:[#allocation2 + $0x58] sm:$0xff] %v238
  %255 = vst [vmem:[#allocation2 + $0x60] sm:$0xff] %v239
  %256 = vst [vmem:[#allocation2 + $0x68] sm:$0xff] %v240
  %257 = vst [vmem:[#allocation2 + $0x70] sm:$0xff] %v241
  %258 = vst [vmem:[#allocation2 + $0x78] sm:$0xff] %v242
  // Predicated region
  $region18: #{gcn_no_skips_forward.9} parent=0 // pred_check
    %p259 = pneg %p14
  $region19: #{gcn_no_skips_forward.9} parent=0 // pred_check_branch
    %261 = sbr.rel (%p259) target = $region21
  $region20: #{gcn_no_skips_forward.9} parent=0 // pred_region
    %v262 = vld [vmem:[#allocation2] sm:$0xff]
    %v263 = vld [vmem:[#allocation2 + $0x8] sm:$0xff]
    %v264 = vld [vmem:[#allocation2 + $0x10] sm:$0xff]
    %v265 = vld [vmem:[#allocation2 + $0x18] sm:$0xff]
    %v266 = vld [vmem:[#allocation2 + $0x20] sm:$0xff]
    %v267 = vld [vmem:[#allocation2 + $0x28] sm:$0xff]
    %v268 = vld [vmem:[#allocation2 + $0x30] sm:$0xff]
    %v269 = vld [vmem:[#allocation2 + $0x38] sm:$0xff]
    %v270 = vld [vmem:[#allocation2 + $0x40] sm:$0xff]
    %v271 = vld [vmem:[#allocation2 + $0x48] sm:$0xff]
    %v272 = vld [vmem:[#allocation2 + $0x50] sm:$0xff]
    %v273 = vld [vmem:[#allocation2 + $0x58] sm:$0xff]
    %v274 = vld [vmem:[#allocation2 + $0x60] sm:$0xff]
    %v275 = vld [vmem:[#allocation2 + $0x68] sm:$0xff]
    %v276 = vld [vmem:[#allocation2 + $0x70] sm:$0xff]
    %v277 = vld [vmem:[#allocation2 + $0x78] sm:$0xff]
    %v278 = vld [vmem:[%s2] sm:$0x1]
    %v280 = vperm.slane %v278, 0
    %v282 = vadd.f32 %v262, %v280
    %v283 = vadd.f32 %v263, %v280
    %v284 = vadd.f32 %v264, %v280
    %v285 = vadd.f32 %v265, %v280
    %v286 = vadd.f32 %v266, %v280
    %v287 = vadd.f32 %v267, %v280
    %v288 = vadd.f32 %v268, %v280
    %v289 = vadd.f32 %v269, %v280
    %v290 = vadd.f32 %v270, %v280
    %v291 = vadd.f32 %v271, %v280
    %v292 = vadd.f32 %v272, %v280
    %v293 = vadd.f32 %v273, %v280
    %v294 = vadd.f32 %v274, %v280
    %v295 = vadd.f32 %v275, %v280
    %v296 = vadd.f32 %v276, %v280
    %v297 = vadd.f32 %v277, %v280
    %298 = vst [vmem:[%s3] sm:$0xff] %v282
    %299 = vst [vmem:[%s3 + $0x8] sm:$0xff] %v283
    %300 = vst [vmem:[%s3 + $0x10] sm:$0xff] %v284
    %301 = vst [vmem:[%s3 + $0x18] sm:$0xff] %v285
    %302 = vst [vmem:[%s3 + $0x20] sm:$0xff] %v286
    %303 = vst [vmem:[%s3 + $0x28] sm:$0xff] %v287
    %304 = vst [vmem:[%s3 + $0x30] sm:$0xff] %v288
    %305 = vst [vmem:[%s3 + $0x38] sm:$0xff] %v289
    %306 = vst [vmem:[%s3 + $0x40] sm:$0xff] %v290
    %307 = vst [vmem:[%s3 + $0x48] sm:$0xff] %v291
    %308 = vst [vmem:[%s3 + $0x50] sm:$0xff] %v292
    %309 = vst [vmem:[%s3 + $0x58] sm:$0xff] %v293
    %310 = vst [vmem:[%s3 + $0x60] sm:$0xff] %v294
    %311 = vst [vmem:[%s3 + $0x68] sm:$0xff] %v295
    %312 = vst [vmem:[%s3 + $0x70] sm:$0xff] %v296
    %313 = vst [vmem:[%s3 + $0x78] sm:$0xff] %v297
  $region21: #{gcn_no_skips_forward.9} parent=0 // pred_fallthru
    _
  // Predicated region
  $region22: #{gcn_no_skips_forward.9} parent=0 // pred_check
    _
  $region23: #{gcn_no_skips_forward.9} parent=0 // pred_check_branch
    %315 = sbr.rel (0) target = $region25
  $region24: #{gcn_no_skips_forward.9} parent=0 // pred_region
    _
  $region25: #{gcn_no_skips_forward.9} parent=0 // pred_fallthru
    _
  // Predicated region
  $region26: #{gcn_no_skips_forward.9} parent=0 // pred_check
    _
  $region27: #{gcn_no_skips_forward.9} parent=0 // pred_check_branch
    %317 = sbr.rel (0) target = $region29
  $region28: #{gcn_no_skips_forward.9} parent=0 // pred_region
    _
  $region29: #{gcn_no_skips_forward.9} parent=0 // pred_fallthru
    _

// kernel: gcn_no_skips_forward.10
$region0: #{gcn_no_skips_forward.10}
  #allocation0 [shape = 'u32[]', space=smem, size = 0x4, offset = 0x4, fixed_abs, tag = 'smem constant byte address 0x4 - core index']
  #allocation1 [shape = 'u32[72,128]{1,0:T(1,128)}', space=vmem, size = 0x9000, scoped, tag = 'internal scratch']
  #allocation2 [shape = 'f32[1,128]{1,0:T(1,128)}', space=vmem, size = 0x200, scoped, tag = 'scratch operand']
  #allocation3 [shape = 'f32[1,128]{1,0:T(1,128)}', space=vmem, size = 0x200, scoped, tag = 'scratch operand']
  #allocation4 [shape = 'f32[2,128]{1,0:T(2,128)}', space=vmem, size = 0x400, scoped, tag = 'scratch operand']
  %s0 = inlined_call_operand.vmem [shape: f32[128,128], index: 0, kind: input, shape index: {}]
  %s1 = inlined_call_operand.vmem [shape: f32[1,128], index: 1, kind: input, shape index: {}]
  %s2 = inlined_call_operand.vmem [shape: f32[1,128], index: 2, kind: input, shape index: {}]
  %s3 = inlined_call_operand.vmem [shape: bf16[128,128], index: 3, kind: output, shape index: {}]
  %s4 = sld [smem:[#allocation0]]
  $region61: #{gcn_no_skips_forward.10} parent=0
    _
  %s6 = ssub.s32 1, %s4
  %s7 = scalar_select 0, %s6, %s4
  loop: start=0, step=1, limit=4
  $region2: #{gcn_no_skips_forward.10} parent=0 // loop_pre_header
    _
  $region3: #{gcn_no_skips_forward.10} parent=0 // loop_header
    %s9 = sphi 0, %s13
    %p10 = scmp.ge.s32.totalorder %s9, 4
    %s16 = sphi 0, %s28
    %s17 = sphi 0, %s24
    %s18 = sphi 0, %s16
    %s19 = sphi 0, %s17
    %s20 = sphi 0, %s18
    %s21 = sphi 0, %s19
    %s31 = sphi 0, %s33
    %s34 = sphi 0, %s31
    %s35 = sphi 0, %s34
    %s51 = sphi 0, %s35
    %s55 = sphi 0, %s55
    %s57 = sphi 0, %s55
    %s58 = sphi 0, %s57
    %s72 = sphi 0, %s58
    %s76 = sphi 0, %s76
    %s78 = sphi 0, %s76
    %s79 = sphi 0, %s78
    %s93 = sphi 0, %s79
    %s99 = sphi 0, %s101
    %s102 = sphi 0, %s99
    %s103 = sphi 0, %s102
    %s119 = sphi 0, %s103
  $region4: #{gcn_no_skips_forward.10} parent=0 // loop_header_branch
    %12 = sbr.rel (%p10) target = $region8
  $region5: #{gcn_no_skips_forward.10} parent=0 // loop_body
    %s14 = ssub.s32 %s9, 1
    %s15 = ssub.s32 %s9, 2
    %s22 = sadd.s32 1, %s17
    %p23 = scmp.ge.s32.totalorder %s22, 1
    %s24 = scalar_select %p23, 0, %s22
    %s25 = sadd.s32 1, %s16
    %s26 = scalar_select %p23, %s25, %s16
    %p27 = scmp.ge.s32.totalorder %s26, 2
    %s28 = scalar_select %p27, 0, %s26
    %s29 = ssub.s32 %s17, %s24
    %p30 = scmp.eq.s32.totalorder %s29, 0
    %s32 = sadd.s32 %s31, 1
    %s33 = scalar_select %p30, %s31, %s32
    %p36 = pneg %p30
    %p37 = scmp.eq.s32.totalorder %s9, 1
    %p38 = por %p36, %p37
    %p39 = scmp.ne.s32.totalorder %s31, %s34
    %p40 = scmp.eq.s32.totalorder %s9, 0
    %p41 = por %p39, %p40
    %p42 = scmp.ne.s32.totalorder %s31, %s34
    %p43 = scmp.eq.s32.totalorder %s14, 1
    %p44 = por %p42, %p43
    %p45 = scmp.ne.s32.totalorder %s34, %s35
    %p46 = scmp.eq.s32.totalorder %s14, 0
    %p47 = por %p45, %p46
    %p48 = scmp.ne.s32.totalorder %s34, %s35
    %p49 = scmp.eq.s32.totalorder %s15, 1
    %p50 = por %p48, %p49
    %p52 = scmp.ne.s32.totalorder %s35, %s51
    %p53 = scmp.eq.s32.totalorder %s15, 0
    %p54 = por %p52, %p53
    %s56 = sadd.s32 %s55, 1
    %p59 = scmp.eq.s32.totalorder %s9, 1
    %p60 = scmp.ne.s32.totalorder %s55, %s57
    %p61 = scmp.eq.s32.totalorder %s9, 0
    %p62 = por %p60, %p61
    %p63 = scmp.ne.s32.totalorder %s55, %s57
    %p64 = scmp.eq.s32.totalorder %s14, 1
    %p65 = por %p63, %p64
    %p66 = scmp.ne.s32.totalorder %s57, %s58
    %p67 = scmp.eq.s32.totalorder %s14, 0
    %p68 = por %p66, %p67
    %p69 = scmp.ne.s32.totalorder %s57, %s58
    %p70 = scmp.eq.s32.totalorder %s15, 1
    %p71 = por %p69, %p70
    %p73 = scmp.ne.s32.totalorder %s58, %s72
    %p74 = scmp.eq.s32.totalorder %s15, 0
    %p75 = por %p73, %p74
    %s77 = sadd.s32 %s76, 1
    %p80 = scmp.eq.s32.totalorder %s9, 1
    %p81 = scmp.ne.s32.totalorder %s76, %s78
    %p82 = scmp.eq.s32.totalorder %s9, 0
    %p83 = por %p81, %p82
    %p84 = scmp.ne.s32.totalorder %s76, %s78
    %p85 = scmp.eq.s32.totalorder %s14, 1
    %p86 = por %p84, %p85
    %p87 = scmp.ne.s32.totalorder %s78, %s79
    %p88 = scmp.eq.s32.totalorder %s14, 0
    %p89 = por %p87, %p88
    %p90 = scmp.ne.s32.totalorder %s78, %s79
    %p91 = scmp.eq.s32.totalorder %s15, 1
    %p92 = por %p90, %p91
    %p94 = scmp.ne.s32.totalorder %s79, %s93
    %p95 = scmp.eq.s32.totalorder %s15, 0
    %p96 = por %p94, %p95
    %s97 = ssub.s32 %s17, %s24
    %p98 = scmp.eq.s32.totalorder %s97, 0
    %s100 = sadd.s32 %s99, 1
    %s101 = scalar_select %p98, %s99, %s100
    %p104 = pneg %p98
    %p105 = scmp.eq.s32.totalorder %s9, 1
    %p106 = por %p104, %p105
    %p107 = scmp.ne.s32.totalorder %s99, %s102
    %p108 = scmp.eq.s32.totalorder %s9, 0
    %p109 = por %p107, %p108
    %p110 = scmp.ne.s32.totalorder %s99, %s102
    %p111 = scmp.eq.s32.totalorder %s14, 1
    %p112 = por %p110, %p111
    %p113 = scmp.ne.s32.totalorder %s102, %s103
    %p114 = scmp.eq.s32.totalorder %s14, 0
    %p115 = por %p113, %p114
    %p116 = scmp.ne.s32.totalorder %s102, %s103
    %p117 = scmp.eq.s32.totalorder %s15, 1
    %p118 = por %p116, %p117
    %p120 = scmp.ne.s32.totalorder %s103, %s119
    %p121 = scmp.eq.s32.totalorder %s15, 0
    %p122 = por %p120, %p121
    %p123 = scmp.le.s32.totalorder 1, %s9
    %p124 = scmp.lt.s32.totalorder %s9, 3
    %p125 = pnand %p123, %p124
    %p126 = pneg %p125
    // Predicated region
    $region9: #{gcn_no_skips_forward.10} parent=5 // pred_check
      _
    $region10: #{gcn_no_skips_forward.10} parent=5 // pred_check_branch
      %128 = sbr.rel (%p125) target = $region12
    $region11: #{gcn_no_skips_forward.10} parent=5 // pred_region
      %s129 = ssub.s32 %s9, 1
      // Predicated region
      $region13: #{gcn_no_skips_forward.10} parent=11 // pred_check
        %p130 = pneg %p47
      $region14: #{gcn_no_skips_forward.10} parent=11 // pred_check_branch
        %132 = sbr.rel (%p130) target = $region16
      $region15: #{gcn_no_skips_forward.10} parent=11 // pred_region
        %s133 = smul.u32 16, %s19
        %p134 = scmp.lt.s32.totalorder %s133, 15
        %s135 = scalar_select %p134, %s133, 15
        %s136 = smul.addr %s135, 8
        %s137 = scalar_lea.vmem %s0, %s136
        %s138 = smul.u32 16, %s19
      $region16: #{gcn_no_skips_forward.10} parent=11 // pred_fallthru
        _
      // Predicated region
      $region17: #{gcn_no_skips_forward.10} parent=11 // pred_check
        %p139 = pneg %p68
      $region18: #{gcn_no_skips_forward.10} parent=11 // pred_check_branch
        %141 = sbr.rel (%p139) target = $region20
      $region19: #{gcn_no_skips_forward.10} parent=11 // pred_region
        _
      $region20: #{gcn_no_skips_forward.10} parent=11 // pred_fallthru
        _
      // Predicated region
      $region21: #{gcn_no_skips_forward.10} parent=11 // pred_check
        %p142 = pneg %p89
      $region22: #{gcn_no_skips_forward.10} parent=11 // pred_check_branch
        %144 = sbr.rel (%p142) target = $region24
      $region23: #{gcn_no_skips_forward.10} parent=11 // pred_region
        _
      $region24: #{gcn_no_skips_forward.10} parent=11 // pred_fallthru
        _
    $region12: #{gcn_no_skips_forward.10} parent=5 // pred_fallthru
      _
    %p145 = scmp.lt.s32.totalorder %s9, 2
    // Predicated region
    $region25: #{gcn_no_skips_forward.10} parent=5 // pred_check
      %p146 = pneg %p145
    $region26: #{gcn_no_skips_forward.10} parent=5 // pred_check_branch
      %148 = sbr.rel (%p146) target = $region28
    $region27: #{gcn_no_skips_forward.10} parent=5 // pred_region
      _
    $region28: #{gcn_no_skips_forward.10} parent=5 // pred_fallthru
      _
    %p149 = scmp.le.s32.totalorder 1, %s9
    %p150 = scmp.lt.s32.totalorder %s9, 3
    %p151 = pnand %p149, %p150
    %p152 = pneg %p151
    // Predicated region
    $region29: #{gcn_no_skips_forward.10} parent=5 // pred_check
      _
    $region30: #{gcn_no_skips_forward.10} parent=5 // pred_check_branch
      %154 = sbr.rel (%p151) target = $region32
    $region31: #{gcn_no_skips_forward.10} parent=5 // pred_region
      %s155 = ssub.s32 %s9, 1
      %s156 = smul.u32 16, %s19
      %p157 = scmp.lt.s32.totalorder %s156, 15
      %s158 = scalar_select %p157, %s156, 15
      %s159 = smul.addr %s158, 8
      %s160 = scalar_lea.vmem %s0, %s159
      %p161 = pneg %p47
      %p162 = pneg %p44
      %p163 = pneg %p68
      %p164 = pneg %p65
      %p165 = pneg %p89
      %p166 = pneg %p86
      %p167 = pneg %p115
      %p168 = pneg %p112
      %s169 = smul.u32 16, %s19
      %p170 = scmp.lt.s32.totalorder %s169, 15
      %s171 = scalar_select %p170, %s169, 15
      %s172 = smul.addr %s171, 4
      %s173 = scalar_lea.vmem %s3, %s172
      %s174 = smul.u32 16, %s19
      %p175 = scmp.lt.s32.totalorder %s174, 15
      %s176 = scalar_select %p175, %s174, 15
      %s177 = smul.addr %s176, 8
      %s178 = scalar_lea.vmem %s0, %s177
      %s179 = smul.u32 16, %s19
      %s180 = smul.u32 16, %s19
      %p181 = scmp.lt.s32.totalorder %s180, 15
      %s182 = scalar_select %p181, %s180, 15
      %s183 = smul.addr %s182, 4
      %s184 = scalar_lea.vmem %s3, %s183
      %s185 = smul.u32 16, %s19
      %s186 = smul.u32 %s19, 128
      %v187 = vlaneseq
      %v188 = vshrl.u32 %v187, 7
      %v189 = vadd.s32 %v188, 8
      %v190 = vadd.s32 %v188, 16
      %v191 = vadd.s32 %v188, 24
      %v192 = vadd.s32 %v188, 32
      %v193 = vadd.s32 %v188, 40
      %v194 = vadd.s32 %v188, 48
      %v195 = vadd.s32 %v188, 56
      %v196 = vadd.s32 %v188, 64
      %v197 = vadd.s32 %v188, 72
      %v198 = vadd.s32 %v188, 80
      %v199 = vadd.s32 %v188, 88
      %v200 = vadd.s32 %v188, 96
      %v201 = vadd.s32 %v188, 104
      %v202 = vadd.s32 %v188, 112
      %v203 = vadd.s32 %v188, 120
      %v204 = vstv %s186
      %v205 = vadd.s32 %v204, %v188
      %v206 = vadd.s32 %v204, %v189
      %v207 = vadd.s32 %v204, %v190
      %v208 = vadd.s32 %v204, %v191
      %v209 = vadd.s32 %v204, %v192
      %v210 = vadd.s32 %v204, %v193
      %v211 = vadd.s32 %v204, %v194
      %v212 = vadd.s32 %v204, %v195
      %v213 = vadd.s32 %v204, %v196
      %v214 = vadd.s32 %v204, %v197
      %v215 = vadd.s32 %v204, %v198
      %v216 = vadd.s32 %v204, %v199
      %v217 = vadd.s32 %v204, %v200
      %v218 = vadd.s32 %v204, %v201
      %v219 = vadd.s32 %v204, %v202
      %v220 = vadd.s32 %v204, %v203
      %vm221 = vcmp.lt.s32.totalorder %v205, 16
      %vm222 = vcmp.lt.s32.totalorder %v206, 16
      %vm223 = vcmp.lt.s32.totalorder %v207, 16
      %vm224 = vcmp.lt.s32.totalorder %v208, 16
      %vm225 = vcmp.lt.s32.totalorder %v209, 16
      %vm226 = vcmp.lt.s32.totalorder %v210, 16
      %vm227 = vcmp.lt.s32.totalorder %v211, 16
      %vm228 = vcmp.lt.s32.totalorder %v212, 16
      %vm229 = vcmp.lt.s32.totalorder %v213, 16
      %vm230 = vcmp.lt.s32.totalorder %v214, 16
      %vm231 = vcmp.lt.s32.totalorder %v215, 16
      %vm232 = vcmp.lt.s32.totalorder %v216, 16
      %vm233 = vcmp.lt.s32.totalorder %v217, 16
      %vm234 = vcmp.lt.s32.totalorder %v218, 16
      %vm235 = vcmp.lt.s32.totalorder %v219, 16
      %vm236 = vcmp.lt.s32.totalorder %v220, 16
      %v237 = vsel %vm221, 1, 0
      %v238 = vsel %vm222, 1, 0
      %v239 = vsel %vm223, 1, 0
      %v240 = vsel %vm224, 1, 0
      %v241 = vsel %vm225, 1, 0
      %v242 = vsel %vm226, 1, 0
      %v243 = vsel %vm227, 1, 0
      %v244 = vsel %vm228, 1, 0
      %v245 = vsel %vm229, 1, 0
      %v246 = vsel %vm230, 1, 0
      %v247 = vsel %vm231, 1, 0
      %v248 = vsel %vm232, 1, 0
      %v249 = vsel %vm233, 1, 0
      %v250 = vsel %vm234, 1, 0
      %v251 = vsel %vm235, 1, 0
      %v252 = vsel %vm236, 1, 0
      %v253 = vcvt.s32.f32 %v237
      %v254 = vcvt.s32.f32 %v238
      %v255 = vcvt.s32.f32 %v239
      %v256 = vcvt.s32.f32 %v240
      %v257 = vcvt.s32.f32 %v241
      %v258 = vcvt.s32.f32 %v242
      %v259 = vcvt.s32.f32 %v243
      %v260 = vcvt.s32.f32 %v244
      %v261 = vcvt.s32.f32 %v245
      %v262 = vcvt.s32.f32 %v246
      %v263 = vcvt.s32.f32 %v247
      %v264 = vcvt.s32.f32 %v248
      %v265 = vcvt.s32.f32 %v249
      %v266 = vcvt.s32.f32 %v250
      %v267 = vcvt.s32.f32 %v251
      %v268 = vcvt.s32.f32 %v252
      %p269 = scmp.eq.s32.totalorder %s18, 0
      %p270 = scmp.eq.s32.totalorder %s19, 0
      %p271 = pnand %p269, %p270
      %p272 = pneg %p271
      // Predicated region
      $region33: #{gcn_no_skips_forward.10} parent=31 // pred_check
        _
      $region34: #{gcn_no_skips_forward.10} parent=31 // pred_check_branch
        %274 = sbr.rel (%p271) target = $region36
      $region35: #{gcn_no_skips_forward.10} parent=31 // pred_region
        %275 = vst [vmem:[#allocation2] sm:$0x1] 0.0
        %276 = vst [vmem:[#allocation3] sm:$0x1] 0.0
      $region36: #{gcn_no_skips_forward.10} parent=31 // pred_fallthru
        _
      // Predicated region
      $region37: #{gcn_no_skips_forward.10} parent=31 // pred_check
        %p277 = pneg %p269
      $region38: #{gcn_no_skips_forward.10} parent=31 // pred_check_branch
        %279 = sbr.rel (%p277) target = $region40
      $region39: #{gcn_no_skips_forward.10} parent=31 // pred_region
        %v280 = vld [vmem:[%s178] sm:$0xff]
        %v281 = vld [vmem:[%s178 + $0x8] sm:$0xff]
        %v282 = vld [vmem:[%s178 + $0x10] sm:$0xff]
        %v283 = vld [vmem:[%s178 + $0x18] sm:$0xff]
        %v284 = vld [vmem:[%s178 + $0x20] sm:$0xff]
        %v285 = vld [vmem:[%s178 + $0x28] sm:$0xff]
        %v286 = vld [vmem:[%s178 + $0x30] sm:$0xff]
        %v287 = vld [vmem:[%s178 + $0x38] sm:$0xff]
        %v288 = vld [vmem:[%s178 + $0x40] sm:$0xff]
        %v289 = vld [vmem:[%s178 + $0x48] sm:$0xff]
        %v290 = vld [vmem:[%s178 + $0x50] sm:$0xff]
        %v291 = vld [vmem:[%s178 + $0x58] sm:$0xff]
        %v292 = vld [vmem:[%s178 + $0x60] sm:$0xff]
        %v293 = vld [vmem:[%s178 + $0x68] sm:$0xff]
        %v294 = vld [vmem:[%s178 + $0x70] sm:$0xff]
        %v295 = vld [vmem:[%s178 + $0x78] sm:$0xff]
        %v296 = vmul.f32 %v280, %v253
        %v297 = vmul.f32 %v281, %v254
        %v298 = vmul.f32 %v282, %v255
        %v299 = vmul.f32 %v283, %v256
        %v300 = vmul.f32 %v284, %v257
        %v301 = vmul.f32 %v285, %v258
        %v302 = vmul.f32 %v286, %v259
        %v303 = vmul.f32 %v287, %v260
        %v304 = vmul.f32 %v288, %v261
        %v305 = vmul.f32 %v289, %v262
        %v306 = vmul.f32 %v290, %v263
        %v307 = vmul.f32 %v291, %v264
        %v308 = vmul.f32 %v292, %v265
        %v309 = vmul.f32 %v293, %v266
        %v310 = vmul.f32 %v294, %v267
        %v311 = vmul.f32 %v295, %v268
        %v312 = vld [vmem:[#allocation2] sm:$0x1]
        %v313 = vadd.f32 %v296, %v297
        %v314 = vadd.f32 %v313, %v298
        %v315 = vadd.f32 %v314, %v299
        %v316 = vadd.f32 %v315, %v300
        %v317 = vadd.f32 %v316, %v301
        %v318 = vadd.f32 %v317, %v302
        %v319 = vadd.f32 %v318, %v303
        %v320 = vadd.f32 %v319, %v304
        %v321 = vadd.f32 %v320, %v305
        %v322 = vadd.f32 %v321, %v306
        %v323 = vadd.f32 %v322, %v307
        %v324 = vadd.f32 %v323, %v308
        %v325 = vadd.f32 %v324, %v309
        %v326 = vadd.f32 %v325, %v310
        %v327 = vadd.f32 %v326, %v311
        %v328 = vrot.slane %v327, 4
        %v329 = vadd.f32 %v327, %v328
        %v330 = vrot.slane %v329, 2
        %v331 = vadd.f32 %v329, %v330
        %v332 = vrot.slane %v331, 1
        %v333 = vadd.f32 %v331, %v332
        %v334 = vadd.f32 %v312, %v333
        %335 = vst [vmem:[#allocation2] sm:$0x1] %v334
        %v336 = vld [vmem:[#allocation3] sm:$0x1]
        %v337 = vmul.f32 %v296, %v296
        %v338 = vmul.f32 %v297, %v297
        %v339 = vmul.f32 %v298, %v298
        %v340 = vmul.f32 %v299, %v299
        %v341 = vmul.f32 %v300, %v300
        %v342 = vmul.f32 %v301, %v301
        %v343 = vmul.f32 %v302, %v302
        %v344 = vmul.f32 %v303, %v303
        %v345 = vmul.f32 %v304, %v304
        %v346 = vmul.f32 %v305, %v305
        %v347 = vmul.f32 %v306, %v306
        %v348 = vmul.f32 %v307, %v307
        %v349 = vmul.f32 %v308, %v308
        %v350 = vmul.f32 %v309, %v309
        %v351 = vmul.f32 %v310, %v310
        %v352 = vmul.f32 %v311, %v311
        %v353 = vadd.f32 %v337, %v338
        %v354 = vadd.f32 %v353, %v339
        %v355 = vadd.f32 %v354, %v340
        %v356 = vadd.f32 %v355, %v341
        %v357 = vadd.f32 %v356, %v342
        %v358 = vadd.f32 %v357, %v343
        %v359 = vadd.f32 %v358, %v344
        %v360 = vadd.f32 %v359, %v345
        %v361 = vadd.f32 %v360, %v346
        %v362 = vadd.f32 %v361, %v347
        %v363 = vadd.f32 %v362, %v348
        %v364 = vadd.f32 %v363, %v349
        %v365 = vadd.f32 %v364, %v350
        %v366 = vadd.f32 %v365, %v351
        %v367 = vadd.f32 %v366, %v352
        %v368 = vrot.slane %v367, 4
        %v369 = vadd.f32 %v367, %v368
        %v370 = vrot.slane %v369, 2
        %v371 = vadd.f32 %v369, %v370
        %v372 = vrot.slane %v371, 1
        %v373 = vadd.f32 %v371, %v372
        %v374 = vadd.f32 %v336, %v373
        %375 = vst [vmem:[#allocation3] sm:$0x1] %v374
        %v376 = vpack.c.bf16 %v296, %v296
        %v377 = vpack.c.bf16 %v297, %v297
        %v378 = vpack.c.bf16 %v298, %v298
        %v379 = vpack.c.bf16 %v299, %v299
        %v380 = vpack.c.bf16 %v300, %v300
        %v381 = vpack.c.bf16 %v301, %v301
        %v382 = vpack.c.bf16 %v302, %v302
        %v383 = vpack.c.bf16 %v303, %v303
        %v384 = vpack.c.bf16 %v304, %v304
        %v385 = vpack.c.bf16 %v305, %v305
        %v386 = vpack.c.bf16 %v306, %v306
        %v387 = vpack.c.bf16 %v307, %v307
        %v388 = vpack.c.bf16 %v308, %v308
        %v389 = vpack.c.bf16 %v309, %v309
        %v390 = vpack.c.bf16 %v310, %v310
        %v391 = vpack.c.bf16 %v311, %v311
        %392 = vst [vmem:[%s184] sm:$0xf] %v376
        %393 = vst [vmem:[%s184 + $0x4] sm:$0xf] %v377
        %394 = vst [vmem:[%s184 + $0x8] sm:$0xf] %v378
        %395 = vst [vmem:[%s184 + $0xc] sm:$0xf] %v379
        %396 = vst [vmem:[%s184 + $0x10] sm:$0xf] %v380
        %397 = vst [vmem:[%s184 + $0x14] sm:$0xf] %v381
        %398 = vst [vmem:[%s184 + $0x18] sm:$0xf] %v382
        %399 = vst [vmem:[%s184 + $0x1c] sm:$0xf] %v383
        %400 = vst [vmem:[%s184 + $0x20] sm:$0xf] %v384
        %401 = vst [vmem:[%s184 + $0x24] sm:$0xf] %v385
        %402 = vst [vmem:[%s184 + $0x28] sm:$0xf] %v386
        %403 = vst [vmem:[%s184 + $0x2c] sm:$0xf] %v387
        %404 = vst [vmem:[%s184 + $0x30] sm:$0xf] %v388
        %405 = vst [vmem:[%s184 + $0x34] sm:$0xf] %v389
        %406 = vst [vmem:[%s184 + $0x38] sm:$0xf] %v390
        %407 = vst [vmem:[%s184 + $0x3c] sm:$0xf] %v391
      $region40: #{gcn_no_skips_forward.10} parent=31 // pred_fallthru
        _
      // Predicated region
      $region41: #{gcn_no_skips_forward.10} parent=31 // pred_check
        _
      $region42: #{gcn_no_skips_forward.10} parent=31 // pred_check_branch
        %409 = sbr.rel (%p271) target = $region44
      $region43: #{gcn_no_skips_forward.10} parent=31 // pred_region
        %v410 = vld [vmem:[#allocation2] sm:$0x1]
        %v411 = vmul.f32 %v410, 0.0625
        %v412 = vld [vmem:[#allocation3] sm:$0x1]
        %v413 = vmul.f32 %v412, 0.0625
        %v414 = vmul.f32 %v411, %v411
        %v415 = vsub.f32 %v413, %v414
        %416 = vst [vmem:[#allocation4] sm:$0x1] %v411
        %v417 = vadd.f32 %v415, 1e-05
        %v418 = vrsqrt.pop %v417
        %v419 = vmul.f32 %v418, %v417
        %v420 = vmul.f32 %v419, %v418
        %v421 = vmul.f32 0.5, %v420
        %v422 = vsub.f32 1.5, %v421
        %v423 = vmul.f32 %v418, %v422
        %vm424 = vweird.f32 %v417
        %vm425 = vweird.f32 %v418
        %vm426 = vmor %vm424, %vm425
        %v427 = vsel %vm426, %v418, %v423
        %428 = vst [vmem:[#allocation4 + $0x1] sm:$0x1] %v427
      $region44: #{gcn_no_skips_forward.10} parent=31 // pred_fallthru
        _
      %p429 = scmp.eq.s32.totalorder %s18, 1
      // Predicated region
      $region45: #{gcn_no_skips_forward.10} parent=31 // pred_check
        %p430 = pneg %p429
      $region46: #{gcn_no_skips_forward.10} parent=31 // pred_check_branch
        %432 = sbr.rel (%p430) target = $region48
      $region47: #{gcn_no_skips_forward.10} parent=31 // pred_region
        %v433 = vld [vmem:[#allocation4] sm:$0x1]
        %v434 = vld [vmem:[#allocation4 + $0x1] sm:$0x1]
        %v435 = vld [vmem:[%s178] sm:$0xff]
        %v436 = vld [vmem:[%s178 + $0x8] sm:$0xff]
        %v437 = vld [vmem:[%s178 + $0x10] sm:$0xff]
        %v438 = vld [vmem:[%s178 + $0x18] sm:$0xff]
        %v439 = vld [vmem:[%s178 + $0x20] sm:$0xff]
        %v440 = vld [vmem:[%s178 + $0x28] sm:$0xff]
        %v441 = vld [vmem:[%s178 + $0x30] sm:$0xff]
        %v442 = vld [vmem:[%s178 + $0x38] sm:$0xff]
        %v443 = vld [vmem:[%s178 + $0x40] sm:$0xff]
        %v444 = vld [vmem:[%s178 + $0x48] sm:$0xff]
        %v445 = vld [vmem:[%s178 + $0x50] sm:$0xff]
        %v446 = vld [vmem:[%s178 + $0x58] sm:$0xff]
        %v447 = vld [vmem:[%s178 + $0x60] sm:$0xff]
        %v448 = vld [vmem:[%s178 + $0x68] sm:$0xff]
        %v449 = vld [vmem:[%s178 + $0x70] sm:$0xff]
        %v450 = vld [vmem:[%s178 + $0x78] sm:$0xff]
        %v451 = vperm.slane %v433, 0
        %v452 = vsub.f32 %v435, %v451
        %v453 = vsub.f32 %v436, %v451
        %v454 = vsub.f32 %v437, %v451
        %v455 = vsub.f32 %v438, %v451
        %v456 = vsub.f32 %v439, %v451
        %v457 = vsub.f32 %v440, %v451
        %v458 = vsub.f32 %v441, %v451
        %v459 = vsub.f32 %v442, %v451
        %v460 = vsub.f32 %v443, %v451
        %v461 = vsub.f32 %v444, %v451
        %v462 = vsub.f32 %v445, %v451
        %v463 = vsub.f32 %v446, %v451
        %v464 = vsub.f32 %v447, %v451
        %v465 = vsub.f32 %v448, %v451
        %v466 = vsub.f32 %v449, %v451
        %v467 = vsub.f32 %v450, %v451
        %v468 = vperm.slane %v434, 0
        %v469 = vmul.f32 %v452, %v468
        %v470 = vmul.f32 %v453, %v468
        %v471 = vmul.f32 %v454, %v468
        %v472 = vmul.f32 %v455, %v468
        %v473 = vmul.f32 %v456, %v468
        %v474 = vmul.f32 %v457, %v468
        %v475 = vmul.f32 %v458, %v468
        %v476 = vmul.f32 %v459, %v468
        %v477 = vmul.f32 %v460, %v468
        %v478 = vmul.f32 %v461, %v468
        %v479 = vmul.f32 %v462, %v468
        %v480 = vmul.f32 %v463, %v468
        %v481 = vmul.f32 %v464, %v468
        %v482 = vmul.f32 %v465, %v468
        %v483 = vmul.f32 %v466, %v468
        %v484 = vmul.f32 %v467, %v468
        %v485 = vld [vmem:[%s1] sm:$0x1]
        %v487 = vperm.slane %v485, 0
        %v489 = vmul.f32 %v469, %v487
        %v490 = vmul.f32 %v470, %v487
        %v491 = vmul.f32 %v471, %v487
        %v492 = vmul.f32 %v472, %v487
        %v493 = vmul.f32 %v473, %v487
        %v494 = vmul.f32 %v474, %v487
        %v495 = vmul.f32 %v475, %v487
        %v496 = vmul.f32 %v476, %v487
        %v497 = vmul.f32 %v477, %v487
        %v498 = vmul.f32 %v478, %v487
        %v499 = vmul.f32 %v479, %v487
        %v500 = vmul.f32 %v480, %v487
        %v501 = vmul.f32 %v481, %v487
        %v502 = vmul.f32 %v482, %v487
        %v503 = vmul.f32 %v483, %v487
        %v504 = vmul.f32 %v484, %v487
        %v505 = vld [vmem:[%s2] sm:$0x1]
        %v507 = vperm.slane %v505, 0
        %v509 = vadd.f32 %v489, %v507
        %v510 = vadd.f32 %v490, %v507
        %v511 = vadd.f32 %v491, %v507
        %v512 = vadd.f32 %v492, %v507
        %v513 = vadd.f32 %v493, %v507
        %v514 = vadd.f32 %v494, %v507
        %v515 = vadd.f32 %v495, %v507
        %v516 = vadd.f32 %v496, %v507
        %v517 = vadd.f32 %v497, %v507
        %v518 = vadd.f32 %v498, %v507
        %v519 = vadd.f32 %v499, %v507
        %v520 = vadd.f32 %v500, %v507
        %v521 = vadd.f32 %v501, %v507
        %v522 = vadd.f32 %v502, %v507
        %v523 = vadd.f32 %v503, %v507
        %v524 = vadd.f32 %v504, %v507
        %v525 = vmax.f32 %v509, 0.0
        %v526 = vmax.f32 %v510, 0.0
        %v527 = vmax.f32 %v511, 0.0
        %v528 = vmax.f32 %v512, 0.0
        %v529 = vmax.f32 %v513, 0.0
        %v530 = vmax.f32 %v514, 0.0
        %v531 = vmax.f32 %v515, 0.0
        %v532 = vmax.f32 %v516, 0.0
        %v533 = vmax.f32 %v517, 0.0
        %v534 = vmax.f32 %v518, 0.0
        %v535 = vmax.f32 %v519, 0.0
        %v536 = vmax.f32 %v520, 0.0
        %v537 = vmax.f32 %v521, 0.0
        %v538 = vmax.f32 %v522, 0.0
        %v539 = vmax.f32 %v523, 0.0
        %v540 = vmax.f32 %v524, 0.0
        %v541 = vmul.f32 %v525, %v253
        %v542 = vmul.f32 %v526, %v254
        %v543 = vmul.f32 %v527, %v255
        %v544 = vmul.f32 %v528, %v256
        %v545 = vmul.f32 %v529, %v257
        %v546 = vmul.f32 %v530, %v258
        %v547 = vmul.f32 %v531, %v259
        %v548 = vmul.f32 %v532, %v260
        %v549 = vmul.f32 %v533, %v261
        %v550 = vmul.f32 %v534, %v262
        %v551 = vmul.f32 %v535, %v263
        %v552 = vmul.f32 %v536, %v264
        %v553 = vmul.f32 %v537, %v265
        %v554 = vmul.f32 %v538, %v266
        %v555 = vmul.f32 %v539, %v267
        %v556 = vmul.f32 %v540, %v268
        %v557 = vpack.c.bf16 %v541, %v541
        %v558 = vpack.c.bf16 %v542, %v542
        %v559 = vpack.c.bf16 %v543, %v543
        %v560 = vpack.c.bf16 %v544, %v544
        %v561 = vpack.c.bf16 %v545, %v545
        %v562 = vpack.c.bf16 %v546, %v546
        %v563 = vpack.c.bf16 %v547, %v547
        %v564 = vpack.c.bf16 %v548, %v548
        %v565 = vpack.c.bf16 %v549, %v549
        %v566 = vpack.c.bf16 %v550, %v550
        %v567 = vpack.c.bf16 %v551, %v551
        %v568 = vpack.c.bf16 %v552, %v552
        %v569 = vpack.c.bf16 %v553, %v553
        %v570 = vpack.c.bf16 %v554, %v554
        %v571 = vpack.c.bf16 %v555, %v555
        %v572 = vpack.c.bf16 %v556, %v556
        %573 = vst [vmem:[%s184] sm:$0xf] %v557
        %574 = vst [vmem:[%s184 + $0x4] sm:$0xf] %v558
        %575 = vst [vmem:[%s184 + $0x8] sm:$0xf] %v559
        %576 = vst [vmem:[%s184 + $0xc] sm:$0xf] %v560
        %577 = vst [vmem:[%s184 + $0x10] sm:$0xf] %v561
        %578 = vst [vmem:[%s184 + $0x14] sm:$0xf] %v562
        %579 = vst [vmem:[%s184 + $0x18] sm:$0xf] %v563
        %580 = vst [vmem:[%s184 + $0x1c] sm:$0xf] %v564
        %581 = vst [vmem:[%s184 + $0x20] sm:$0xf] %v565
        %582 = vst [vmem:[%s184 + $0x24] sm:$0xf] %v566
        %583 = vst [vmem:[%s184 + $0x28] sm:$0xf] %v567
        %584 = vst [vmem:[%s184 + $0x2c] sm:$0xf] %v568
        %585 = vst [vmem:[%s184 + $0x30] sm:$0xf] %v569
        %586 = vst [vmem:[%s184 + $0x34] sm:$0xf] %v570
        %587 = vst [vmem:[%s184 + $0x38] sm:$0xf] %v571
        %588 = vst [vmem:[%s184 + $0x3c] sm:$0xf] %v572
      $region48: #{gcn_no_skips_forward.10} parent=31 // pred_fallthru
        _
      %s589 = smul.u32 16, %s19
      %p590 = scmp.lt.s32.totalorder %s589, 15
      %s591 = scalar_select %p590, %s589, 15
      %s592 = smul.addr %s591, 4
      %s593 = scalar_lea.vmem %s3, %s592
      // Predicated region
      $region49: #{gcn_no_skips_forward.10} parent=31 // pred_check
        %p594 = pneg %p112
      $region50: #{gcn_no_skips_forward.10} parent=31 // pred_check_branch
        %596 = sbr.rel (%p594) target = $region52
      $region51: #{gcn_no_skips_forward.10} parent=31 // pred_region
        %s597 = smul.u32 16, %s19
      $region52: #{gcn_no_skips_forward.10} parent=31 // pred_fallthru
        _
      // Predicated region
      $region53: #{gcn_no_skips_forward.10} parent=31 // pred_check
        %p598 = pneg %p112
      $region54: #{gcn_no_skips_forward.10} parent=31 // pred_check_branch
        %600 = sbr.rel (%p598) target = $region56
      $region55: #{gcn_no_skips_forward.10} parent=31 // pred_region
        %s601 = smul.u32 16, %s19
        %p602 = scmp.lt.s32.totalorder %s601, 15
        %s603 = scalar_select %p602, %s601, 15
        %s604 = smul.addr %s603, 4
        %s605 = scalar_lea.vmem %s3, %s604
      $region56: #{gcn_no_skips_forward.10} parent=31 // pred_fallthru
        _
    $region32: #{gcn_no_skips_forward.10} parent=5 // pred_fallthru
      _
    %p606 = scmp.le.s32.totalorder 2, %s9
    // Predicated region
    $region57: #{gcn_no_skips_forward.10} parent=5 // pred_check
      %p607 = pneg %p606
    $region58: #{gcn_no_skips_forward.10} parent=5 // pred_check_branch
      %609 = sbr.rel (%p607) target = $region60
    $region59: #{gcn_no_skips_forward.10} parent=5 // pred_region
      %s610 = ssub.s32 %s9, 2
    $region60: #{gcn_no_skips_forward.10} parent=5 // pred_fallthru
      _
  $region6: #{gcn_no_skips_forward.10} parent=0 // loop_footer
    %s13 = sadd.s32 1, %s9
  $region7: #{gcn_no_skips_forward.10} parent=0 // loop_footer_branch
    %8 = sbr.rel target = $region3
  $region8: #{gcn_no_skips_forward.10} parent=0 // loop_exit
    _

</llo_original>
